<compile_context>
chip_gen: v5e
topology: v5e:2x2
jax: 0.10.0
libtpu: 0.0.40
codegen_flags: <defaults>
</compile_context>

<pallas_src>
import functools

import jax
import jax.numpy as jnp
from jax.experimental import pallas as pl
from jax.experimental.pallas import tpu as pltpu


# Packed output lane layout (last axis, width 24):
#   0: scores   1: labels (stored as f32, exact for small ints)
#   2: object mask (0./1.)   3: spare (0.)
#   4:8   norm xywh boxes          8:12  scaled xywh boxes
#   12:16 flipped cxcywh boxes     16:20 norm xywh boxes (flipped)
#   20:24 scaled xywh boxes (flipped)
_OUT_W = 24


def _postprocess_kernel(nspecial, nobj_id,
                        logits_ref, boxes_ref, pad_ref, scale_ref, out_ref):
    logits = logits_ref[...].astype(jnp.float32)            # (TB, Q, C), native layout
    C = logits.shape[-1]

    # --- masked softmax max-prob / first-occurrence argmax ------------------
    cls_iota = jax.lax.broadcasted_iota(jnp.int32, (1, 1, C), 2)
    bias = jnp.where(cls_iota < nspecial, jnp.float32(-jnp.inf), jnp.float32(0.0))
    masked = logits + bias                                   # one broadcast add

    mx = jnp.max(masked, axis=-1, keepdims=True)             # (TB, Q, 1)
    sum_e = jnp.sum(jnp.exp(masked - mx), axis=-1, keepdims=True)
    # max softmax prob == exp(mx - mx) / sum == 1 / sum  (exact reciprocal)
    scores = pl.reciprocal(sum_e, approx=False)              # (TB, Q, 1)

    # first-occurrence argmax of the masked logits (float min-reduce; labels
    # are small ints, exactly representable in f32)
    idx = jnp.where(masked == mx, cls_iota.astype(jnp.float32), jnp.float32(C))
    labels_f = jnp.min(idx, axis=-1, keepdims=True)          # (TB, Q, 1)

    pad = pad_ref[...]                                       # (TB, Q, 1) int32
    obj = jnp.logical_and(pad == 0, labels_f != jnp.float32(nobj_id))

    # --- box conversions on whole (TB, Q, 4) groups --------------------------
    boxes = boxes_ref[...].astype(jnp.float32)               # (TB, Q, 4): cx,cy,w,h
    shifted = jnp.concatenate([boxes[..., 2:4], boxes[..., 0:2]], axis=-1)  # w,h,cx,cy

    lane4 = jax.lax.broadcasted_iota(jnp.int32, (1, 1, 4), 2)
    half = jnp.where(lane4 < 2, jnp.float32(-0.5), jnp.float32(0.0))
    flip_m = jnp.where(lane4 == 0, jnp.float32(-1.0), jnp.float32(1.0))
    flip_a = jnp.where(lane4 == 0, jnp.float32(1.0), jnp.float32(0.0))
    scale = scale_ref[...]                                    # (TB, 1, 4) = (w,h,w,h)

    xywh = boxes + half * shifted                             # (cx-w/2, cy-h/2, w, h)
    flipped = boxes * flip_m + flip_a                         # (1-cx, cy, w, h)
    xywh_f = flipped + half * shifted
    scaled = xywh * scale
    scaled_f = xywh_f * scale

    # meta lane group: [scores, labels, mask, 0]
    meta = jnp.where(lane4 == 0, scores,
                     jnp.where(lane4 == 1, labels_f,
                               jnp.where(lane4 == 2, obj.astype(jnp.float32),
                                         jnp.float32(0.0))))

    out_ref[...] = jnp.concatenate(
        [meta, xywh, scaled, flipped, xywh_f, scaled_f], axis=-1)   # (TB, Q, 24)


def _choose_batch_block(B, per_batch_bytes, vmem_budget_bytes=12 * 1024 * 1024):
    """Largest divisor of B that (a) leaves >= 2 grid steps when B >= 2 (so both
    v7x TensorCores get work and the DMA pipeline overlaps) and (b) keeps the
    double-buffered per-step footprint under the VMEM budget (safe on v7x's
    smaller 64 MiB VMEM / 32 MiB default scoped limit)."""
    if B <= 1:
        return 1
    cap = max(1, B // 2)
    tb = 1
    for cand in range(2, cap + 1):
        if B % cand == 0 and 2 * cand * per_batch_bytes <= vmem_budget_bytes:
            tb = cand
    return tb


def postprocess_pallas(label_logits, bbox_preds, tgt_padding_mask, img_shapes,
                       *, nspecial, nobj_label_id, batch_block=None):
    """Returns (scores, labels, object_mask, xywh_boxes, scaled_boxes,
    boxes_flipped, xywh_boxes_flipped, scaled_boxes_flipped)."""
    B, Q, C = label_logits.shape
    assert bbox_preds.shape == (B, Q, 4)
    assert tgt_padding_mask.shape == (B, Q)
    assert img_shapes.shape == (B, 2)

    # Tiny side inputs. The big tensors (logits, boxes) are passed untouched:
    # native layout + native dtype, so the kernel DMA is their only HBM pass.
    pad = tgt_padding_mask.astype(jnp.int32).reshape(B, Q, 1)
    img_h = img_shapes[:, 0].astype(jnp.float32)
    img_w = img_shapes[:, 1].astype(jnp.float32)
    scale_fct = jnp.stack([img_w, img_h, img_w, img_h], axis=-1).reshape(B, 1, 4)

    per_batch_bytes = (Q * C * label_logits.dtype.itemsize   # logits
                       + Q * 4 * bbox_preds.dtype.itemsize   # boxes
                       + Q * 4                               # padding mask (i32)
                       + Q * _OUT_W * 4                      # packed output
                       + 16)                                 # scale row
    TB = batch_block if batch_block is not None else _choose_batch_block(B, per_batch_bytes)
    assert B % TB == 0
    grid = (B // TB,)
    # TODO(synk): add a Q-axis grid dimension if Q ever grows far beyond the
    # typical DETR 100-300 query slots (blocks here carry the full Q extent).

    kernel = functools.partial(_postprocess_kernel, nspecial, nobj_label_id)

    out = pl.pallas_call(
        kernel,
        out_shape=jax.ShapeDtypeStruct((B, Q, _OUT_W), jnp.float32),
        grid_spec=pltpu.PrefetchScalarGridSpec(
            num_scalar_prefetch=0,
            grid=grid,
            in_specs=[
                pl.BlockSpec((TB, Q, C), lambda i: (i, 0, 0)),   # logits (native)
                pl.BlockSpec((TB, Q, 4), lambda i: (i, 0, 0)),   # boxes (native dtype)
                pl.BlockSpec((TB, Q, 1), lambda i: (i, 0, 0)),   # padding mask
                pl.BlockSpec((TB, 1, 4), lambda i: (i, 0, 0)),   # per-image (w,h,w,h)
            ],
            out_specs=pl.BlockSpec((TB, Q, _OUT_W), lambda i: (i, 0, 0)),
        ),
        compiler_params=pltpu.CompilerParams(
            dimension_semantics=("parallel",)),
    )(label_logits, bbox_preds, pad, scale_fct)

    # Pure slicing in the wrapper (no transposes); downstream code that can
    # consume the packed (B, Q, 24) slab directly should use `out` as-is.
    scores = out[..., 0]
    labels = out[..., 1].astype(jnp.int32)
    obj_mask = out[..., 2] > 0.5
    xywh = out[..., 4:8]
    scaled = out[..., 8:12]
    flipped = out[..., 12:16]
    xywh_f = out[..., 16:20]
    scaled_f = out[..., 20:24]
    return scores, labels, obj_mask, xywh, scaled, flipped, xywh_f, scaled_f


def _reference(logits, pad, boxes, img_shapes, nspecial, nobj_id):
    l = logits.at[..., :nspecial].set(-jnp.inf)
    prob = jax.nn.softmax(l, axis=-1)
    scores = prob.max(-1)
    labels = prob.argmax(-1)
    mask = (~pad) & (labels != nobj_id)
    cx, cy, w, h = boxes[..., 0], boxes[..., 1], boxes[..., 2], boxes[..., 3]
    xywh = jnp.stack([cx - 0.5 * w, cy - 0.5 * h, w, h], axis=-1)
    img_h, img_w = img_shapes[:, 0], img_shapes[:, 1]
    scale = jnp.stack([img_w, img_h, img_w, img_h], axis=-1)[:, None, :]
    scaled = xywh * scale
    flipped = boxes * jnp.array([-1., 1., 1., 1.]) + jnp.array([1., 0., 0., 0.])
    fcx = flipped[..., 0]
    xywh_f = jnp.stack([fcx - 0.5 * w, cy - 0.5 * h, w, h], axis=-1)
    scaled_f = xywh_f * scale
    return scores, labels, mask, xywh, scaled, flipped, xywh_f, scaled_f


if __name__ == "__main__":
    key = jax.random.PRNGKey(0)
    B, Q, C = 4, 100, 32        # batch, DETR query slots, categories (last = <NOBJ>)
    NSPECIAL = 4                # bos/pad/eos/unk
    NOBJ_ID = C - 1             # cat_dict.symbols[-1] == '<NOBJ>'

    k1, k2 = jax.random.split(key, 2)
    label_logits = jax.random.normal(k1, (B, Q, C), dtype=jnp.float32)
    bbox_preds = jax.random.uniform(k2, (B, Q, 4), dtype=jnp.float32,
                                    minval=0.05, maxval=0.45)
    # last few query slots of each sequence are padding
    tgt_padding_mask = jnp.zeros((B, Q), bool).at[:, -7:].set(True)
    img_shapes = jnp.array([[480.0, 640.0], [512.0, 384.0],
                            [600.0, 400.0], [333.0, 500.0]], jnp.float32)

    outs = postprocess_pallas(label_logits, bbox_preds, tgt_padding_mask,
                              img_shapes, nspecial=NSPECIAL,
                              nobj_label_id=NOBJ_ID)
    outs = jax.block_until_ready(outs)

    refs = _reference(label_logits, tgt_padding_mask, bbox_preds, img_shapes,
                      NSPECIAL, NOBJ_ID)

    scores, labels, obj_mask, xywh, scaled, flipped, xywh_f, scaled_f = outs
    assert jnp.allclose(scores, refs[0], atol=1e-5)
    assert jnp.array_equal(labels, refs[1].astype(jnp.int32))
    assert jnp.array_equal(obj_mask, refs[2])
    for got, want in zip((xywh, scaled, flipped, xywh_f, scaled_f), refs[3:]):
        assert jnp.allclose(got, want, atol=1e-4)

    # TODO(synk): per-image ragged selection (lab[m].tolist()), COCO id / name
    # dictionary lookups and python result-dict assembly remain host-side.

    print("KERNEL_OK")
</pallas_src>

<mosaic_0001>
module attributes {stable_mosaic.version = 11 : i64} {
  func.func @_postprocess_kernel(%arg0: i32, %arg1: memref<2x100x32xf32, #tpu.memory_space<vmem>>, %arg2: memref<2x100x4xf32, #tpu.memory_space<vmem>>, %arg3: memref<2x100x1xi32, #tpu.memory_space<vmem>>, %arg4: memref<2x1x4xf32, #tpu.memory_space<vmem>>, %arg5: memref<2x100x24xf32, #tpu.memory_space<vmem>>) attributes {dimension_semantics = [#tpu.dimension_semantics<parallel>], iteration_bounds = array<i64: 2>, scalar_prefetch = 0 : i64, scratch_operands = 0 : i64, tpu.core_type = #tpu.core_type<tc>, window_params = [{transform_indices = @transform_0, window_bounds = array<i64: 2, 100, 32>}, {transform_indices = @transform_1, window_bounds = array<i64: 2, 100, 4>}, {transform_indices = @transform_2, window_bounds = array<i64: 2, 100, 1>}, {transform_indices = @transform_3, window_bounds = array<i64: 2, 1, 4>}, {transform_indices = @transform_4, window_bounds = array<i64: 2, 100, 24>}]} {
    %c0 = arith.constant 0 : index
    %c0_0 = arith.constant 0 : index
    %c0_1 = arith.constant 0 : index
    %0 = vector.load %arg1[%c0, %c0_0, %c0_1] : memref<2x100x32xf32, #tpu.memory_space<vmem>>, vector<2x100x32xf32>
    %1 = tpu.iota {dimensions = array<i32: 2>} : vector<1x1x32xi32>
    %c4_i32 = arith.constant 4 : i32
    %2 = vector.broadcast %c4_i32 : i32 to vector<1x1x32xi32>
    %3 = arith.cmpi slt, %1, %2 : vector<1x1x32xi32>
    %cst = arith.constant 0xFF800000 : f32
    %cst_2 = arith.constant 0.000000e+00 : f32
    %4 = vector.broadcast %cst : f32 to vector<1x1x32xf32>
    %5 = vector.broadcast %cst_2 : f32 to vector<1x1x32xf32>
    %6 = arith.select %3, %4, %5 : vector<1x1x32xi1>, vector<1x1x32xf32>
    %7 = vector.broadcast %6 : vector<1x1x32xf32> to vector<2x100x32xf32>
    %8 = arith.addf %0, %7 : vector<2x100x32xf32>
    %cst_3 = arith.constant dense<0xFF800000> : vector<2x100xf32>
    %9 = vector.multi_reduction <maximumf>, %8, %cst_3 [2] : vector<2x100x32xf32> to vector<2x100xf32>
    %10 = vector.shape_cast %9 : vector<2x100xf32> to vector<2x100x1xf32>
    %11 = vector.broadcast %10 : vector<2x100x1xf32> to vector<2x100x32xf32>
    %12 = arith.subf %8, %11 : vector<2x100x32xf32>
    %13 = math.exp %12 : vector<2x100x32xf32>
    %cst_4 = arith.constant dense<0.000000e+00> : vector<2x100xf32>
    %14 = vector.multi_reduction <add>, %13, %cst_4 [2] : vector<2x100x32xf32> to vector<2x100xf32>
    %15 = vector.shape_cast %14 : vector<2x100xf32> to vector<2x100x1xf32>
    %16 = tpu.reciprocal %15 : vector<2x100x1xf32> -> vector<2x100x1xf32>
    %17 = vector.broadcast %10 : vector<2x100x1xf32> to vector<2x100x32xf32>
    %18 = arith.cmpf oeq, %8, %17 : vector<2x100x32xf32>
    %19 = arith.sitofp %1 : vector<1x1x32xi32> to vector<1x1x32xf32>
    %cst_5 = arith.constant 3.200000e+01 : f32
    %20 = vector.shape_cast %19 : vector<1x1x32xf32> to vector<1x1x32xf32>
    %21 = vector.broadcast %20 : vector<1x1x32xf32> to vector<2x100x32xf32>
    %22 = vector.broadcast %cst_5 : f32 to vector<2x100x32xf32>
    %23 = arith.select %18, %21, %22 : vector<2x100x32xi1>, vector<2x100x32xf32>
    %cst_6 = arith.constant dense<0x7F800000> : vector<2x100xf32>
    %24 = vector.multi_reduction <minimumf>, %23, %cst_6 [2] : vector<2x100x32xf32> to vector<2x100xf32>
    %25 = vector.shape_cast %24 : vector<2x100xf32> to vector<2x100x1xf32>
    %c0_7 = arith.constant 0 : index
    %c0_8 = arith.constant 0 : index
    %c0_9 = arith.constant 0 : index
    %26 = vector.load %arg3[%c0_7, %c0_8, %c0_9] : memref<2x100x1xi32, #tpu.memory_space<vmem>>, vector<2x100x1xi32>
    %c0_i32 = arith.constant 0 : i32
    %27 = vector.broadcast %c0_i32 : i32 to vector<2x100x1xi32>
    %28 = arith.cmpi eq, %26, %27 : vector<2x100x1xi32>
    %cst_10 = arith.constant 3.100000e+01 : f32
    %29 = vector.broadcast %cst_10 : f32 to vector<2x100x1xf32>
    %30 = arith.cmpf one, %25, %29 : vector<2x100x1xf32>
    %31 = arith.andi %28, %30 : vector<2x100x1xi1>
    %c0_11 = arith.constant 0 : index
    %c0_12 = arith.constant 0 : index
    %c0_13 = arith.constant 0 : index
    %32 = vector.load %arg2[%c0_11, %c0_12, %c0_13] : memref<2x100x4xf32, #tpu.memory_space<vmem>>, vector<2x100x4xf32>
    %33 = vector.extract_strided_slice %32 {offsets = [0, 0, 2], sizes = [2, 100, 2], strides = [1, 1, 1]} : vector<2x100x4xf32> to vector<2x100x2xf32>
    %34 = vector.extract_strided_slice %32 {offsets = [0, 0, 0], sizes = [2, 100, 2], strides = [1, 1, 1]} : vector<2x100x4xf32> to vector<2x100x2xf32>
    %35 = tpu.concatenate %33, %34 in 2 : vector<2x100x2xf32>, vector<2x100x2xf32> -> vector<2x100x4xf32>
    %36 = tpu.iota {dimensions = array<i32: 2>} : vector<1x1x4xi32>
    %c2_i32 = arith.constant 2 : i32
    %37 = vector.broadcast %c2_i32 : i32 to vector<1x1x4xi32>
    %38 = arith.cmpi slt, %36, %37 : vector<1x1x4xi32>
    %cst_14 = arith.constant -5.000000e-01 : f32
    %cst_15 = arith.constant 0.000000e+00 : f32
    %39 = vector.broadcast %cst_14 : f32 to vector<1x1x4xf32>
    %40 = vector.broadcast %cst_15 : f32 to vector<1x1x4xf32>
    %41 = arith.select %38, %39, %40 : vector<1x1x4xi1>, vector<1x1x4xf32>
    %c0_i32_16 = arith.constant 0 : i32
    %42 = vector.broadcast %c0_i32_16 : i32 to vector<1x1x4xi32>
    %43 = arith.cmpi eq, %36, %42 : vector<1x1x4xi32>
    %cst_17 = arith.constant -1.000000e+00 : f32
    %cst_18 = arith.constant 1.000000e+00 : f32
    %44 = vector.broadcast %cst_17 : f32 to vector<1x1x4xf32>
    %45 = vector.broadcast %cst_18 : f32 to vector<1x1x4xf32>
    %46 = arith.select %43, %44, %45 : vector<1x1x4xi1>, vector<1x1x4xf32>
    %c0_i32_19 = arith.constant 0 : i32
    %47 = vector.broadcast %c0_i32_19 : i32 to vector<1x1x4xi32>
    %48 = arith.cmpi eq, %36, %47 : vector<1x1x4xi32>
    %cst_20 = arith.constant 1.000000e+00 : f32
    %cst_21 = arith.constant 0.000000e+00 : f32
    %49 = vector.broadcast %cst_20 : f32 to vector<1x1x4xf32>
    %50 = vector.broadcast %cst_21 : f32 to vector<1x1x4xf32>
    %51 = arith.select %48, %49, %50 : vector<1x1x4xi1>, vector<1x1x4xf32>
    %c0_22 = arith.constant 0 : index
    %c0_23 = arith.constant 0 : index
    %c0_24 = arith.constant 0 : index
    %52 = vector.load %arg4[%c0_22, %c0_23, %c0_24] : memref<2x1x4xf32, #tpu.memory_space<vmem>>, vector<2x1x4xf32>
    %53 = vector.broadcast %41 : vector<1x1x4xf32> to vector<2x100x4xf32>
    %54 = arith.mulf %53, %35 : vector<2x100x4xf32>
    %55 = arith.addf %32, %54 : vector<2x100x4xf32>
    %56 = vector.broadcast %46 : vector<1x1x4xf32> to vector<2x100x4xf32>
    %57 = arith.mulf %32, %56 : vector<2x100x4xf32>
    %58 = vector.broadcast %51 : vector<1x1x4xf32> to vector<2x100x4xf32>
    %59 = arith.addf %57, %58 : vector<2x100x4xf32>
    %60 = vector.broadcast %41 : vector<1x1x4xf32> to vector<2x100x4xf32>
    %61 = arith.mulf %60, %35 : vector<2x100x4xf32>
    %62 = arith.addf %59, %61 : vector<2x100x4xf32>
    %63 = vector.broadcast %52 : vector<2x1x4xf32> to vector<2x100x4xf32>
    %64 = arith.mulf %55, %63 : vector<2x100x4xf32>
    %65 = vector.broadcast %52 : vector<2x1x4xf32> to vector<2x100x4xf32>
    %66 = arith.mulf %62, %65 : vector<2x100x4xf32>
    %c0_i32_25 = arith.constant 0 : i32
    %67 = vector.broadcast %c0_i32_25 : i32 to vector<1x1x4xi32>
    %68 = arith.cmpi eq, %36, %67 : vector<1x1x4xi32>
    %c1_i32 = arith.constant 1 : i32
    %69 = vector.broadcast %c1_i32 : i32 to vector<1x1x4xi32>
    %70 = arith.cmpi eq, %36, %69 : vector<1x1x4xi32>
    %c2_i32_26 = arith.constant 2 : i32
    %71 = vector.broadcast %c2_i32_26 : i32 to vector<1x1x4xi32>
    %72 = arith.cmpi eq, %36, %71 : vector<1x1x4xi32>
    %73 = arith.extui %31 : vector<2x100x1xi1> to vector<2x100x1xi32>
    %74 = arith.sitofp %73 : vector<2x100x1xi32> to vector<2x100x1xf32>
    %cst_27 = arith.constant 0.000000e+00 : f32
    %75 = vector.shape_cast %72 : vector<1x1x4xi1> to vector<1x1x4xi1>
    %76 = vector.broadcast %75 : vector<1x1x4xi1> to vector<2x100x4xi1>
    %77 = vector.shape_cast %74 : vector<2x100x1xf32> to vector<2x100x1xf32>
    %78 = vector.broadcast %77 : vector<2x100x1xf32> to vector<2x100x4xf32>
    %79 = vector.broadcast %cst_27 : f32 to vector<2x100x4xf32>
    %80 = arith.select %76, %78, %79 : vector<2x100x4xi1>, vector<2x100x4xf32>
    %81 = vector.shape_cast %70 : vector<1x1x4xi1> to vector<1x1x4xi1>
    %82 = vector.broadcast %81 : vector<1x1x4xi1> to vector<2x100x4xi1>
    %83 = vector.shape_cast %25 : vector<2x100x1xf32> to vector<2x100x1xf32>
    %84 = vector.broadcast %83 : vector<2x100x1xf32> to vector<2x100x4xf32>
    %85 = arith.select %82, %84, %80 : vector<2x100x4xi1>, vector<2x100x4xf32>
    %86 = vector.shape_cast %68 : vector<1x1x4xi1> to vector<1x1x4xi1>
    %87 = vector.broadcast %86 : vector<1x1x4xi1> to vector<2x100x4xi1>
    %88 = vector.shape_cast %16 : vector<2x100x1xf32> to vector<2x100x1xf32>
    %89 = vector.broadcast %88 : vector<2x100x1xf32> to vector<2x100x4xf32>
    %90 = arith.select %87, %89, %85 : vector<2x100x4xi1>, vector<2x100x4xf32>
    %91 = tpu.concatenate %90, %55, %64, %59, %62, %66 in 2 : vector<2x100x4xf32>, vector<2x100x4xf32>, vector<2x100x4xf32>, vector<2x100x4xf32>, vector<2x100x4xf32>, vector<2x100x4xf32> -> vector<2x100x24xf32>
    %c0_28 = arith.constant 0 : index
    %c0_29 = arith.constant 0 : index
    %c0_30 = arith.constant 0 : index
    %92 = vector.load %arg5[%c0_28, %c0_29, %c0_30] : memref<2x100x24xf32, #tpu.memory_space<vmem>>, vector<2x100x24xf32>
    tpu.vector_store %arg5[%c0_28, %c0_29, %c0_30], %91 {strides = array<i32>} : memref<2x100x24xf32, #tpu.memory_space<vmem>>, vector<2x100x24xf32>,
    return
  }
  func.func @transform_0(%arg0: i32) -> (i32, i32, i32) {
    %c0_i32 = arith.constant 0 : i32
    %c0_i32_0 = arith.constant 0 : i32
    %c0_i32_1 = arith.constant 0 : i32
    return %arg0, %c0_i32, %c0_i32_0 : i32, i32, i32
  }
  func.func @transform_1(%arg0: i32) -> (i32, i32, i32) {
    %c0_i32 = arith.constant 0 : i32
    %c0_i32_0 = arith.constant 0 : i32
    %c0_i32_1 = arith.constant 0 : i32
    return %arg0, %c0_i32, %c0_i32_0 : i32, i32, i32
  }
  func.func @transform_2(%arg0: i32) -> (i32, i32, i32) {
    %c0_i32 = arith.constant 0 : i32
    %c0_i32_0 = arith.constant 0 : i32
    %c0_i32_1 = arith.constant 0 : i32
    return %arg0, %c0_i32, %c0_i32_0 : i32, i32, i32
  }
  func.func @transform_3(%arg0: i32) -> (i32, i32, i32) {
    %c0_i32 = arith.constant 0 : i32
    %c0_i32_0 = arith.constant 0 : i32
    %c0_i32_1 = arith.constant 0 : i32
    return %arg0, %c0_i32, %c0_i32_0 : i32, i32, i32
  }
  func.func @transform_4(%arg0: i32) -> (i32, i32, i32) {
    %c0_i32 = arith.constant 0 : i32
    %c0_i32_0 = arith.constant 0 : i32
    %c0_i32_1 = arith.constant 0 : i32
    return %arg0, %c0_i32, %c0_i32_0 : i32, i32, i32
  }
}

</mosaic_0001>

<llo_original>
// kernel: tpu_custom_call.1
$region0: #{tpu_custom_call.1}
  #allocation0 [shape = 'u32[]', space=smem, size = 0x4, offset = 0x4, fixed_abs, tag = 'smem constant byte address 0x4 - core index']
  #allocation1 [shape = 'u32[72,128]{1,0:T(1,128)}', space=vmem, size = 0x9000, scoped, tag = 'internal scratch']
  %s0 = inlined_call_operand.vmem [shape: f32[4,100,32], index: 0, kind: input, shape index: {}]
  %s1 = inlined_call_operand.vmem [shape: f32[4,100,4], index: 1, kind: input, shape index: {}]
  %s2 = inlined_call_operand.vmem [shape: s32[4,100,1], index: 2, kind: input, shape index: {}]
  %s3 = inlined_call_operand.vmem [shape: f32[4,1,4], index: 3, kind: input, shape index: {}]
  %s4 = inlined_call_operand.vmem [shape: f32[4,100,24], index: 4, kind: output, shape index: {}]
  %s5 = sld [smem:[#allocation0]]
  $region49: #{tpu_custom_call.1} parent=0
    _
  %s7 = ssub.s32 1, %s5
  %s8 = scalar_select 0, %s7, %s5
  loop: start=0, step=1, limit=4
  $region2: #{tpu_custom_call.1} parent=0 // loop_pre_header
    _
  $region3: #{tpu_custom_call.1} parent=0 // loop_header
    %s10 = sphi 0, %s14
    %p11 = scmp.ge.s32.totalorder %s10, 4
    %s20 = sphi 0, %s22
    %s23 = sphi 0, %s20
    %s24 = sphi 0, %s23
    %s40 = sphi 0, %s24
    %s46 = sphi 0, %s48
    %s49 = sphi 0, %s46
    %s50 = sphi 0, %s49
    %s66 = sphi 0, %s50
    %s72 = sphi 0, %s74
    %s75 = sphi 0, %s72
    %s76 = sphi 0, %s75
    %s92 = sphi 0, %s76
    %s98 = sphi 0, %s100
    %s101 = sphi 0, %s98
    %s102 = sphi 0, %s101
    %s118 = sphi 0, %s102
    %s124 = sphi 0, %s126
    %s127 = sphi 0, %s124
    %s128 = sphi 0, %s127
    %s144 = sphi 0, %s128
  $region4: #{tpu_custom_call.1} parent=0 // loop_header_branch
    %13 = sbr.rel (%p11) target = $region8
  $region5: #{tpu_custom_call.1} parent=0 // loop_body
    %s15 = ssub.s32 %s10, 1
    %s16 = ssub.s32 %s10, 2
    %s17 = sadd.s32 %s10, 1
    %s18 = ssub.s32 %s10, %s17
    %p19 = scmp.eq.s32.totalorder %s18, 0
    %s21 = sadd.s32 %s20, 1
    %s22 = scalar_select %p19, %s20, %s21
    %p25 = pneg %p19
    %p26 = scmp.eq.s32.totalorder %s10, 1
    %p27 = por %p25, %p26
    %p28 = scmp.ne.s32.totalorder %s20, %s23
    %p29 = scmp.eq.s32.totalorder %s10, 0
    %p30 = por %p28, %p29
    %p31 = scmp.ne.s32.totalorder %s20, %s23
    %p32 = scmp.eq.s32.totalorder %s15, 1
    %p33 = por %p31, %p32
    %p34 = scmp.ne.s32.totalorder %s23, %s24
    %p35 = scmp.eq.s32.totalorder %s15, 0
    %p36 = por %p34, %p35
    %p37 = scmp.ne.s32.totalorder %s23, %s24
    %p38 = scmp.eq.s32.totalorder %s16, 1
    %p39 = por %p37, %p38
    %p41 = scmp.ne.s32.totalorder %s24, %s40
    %p42 = scmp.eq.s32.totalorder %s16, 0
    %p43 = por %p41, %p42
    %s44 = ssub.s32 %s10, %s17
    %p45 = scmp.eq.s32.totalorder %s44, 0
    %s47 = sadd.s32 %s46, 1
    %s48 = scalar_select %p45, %s46, %s47
    %p51 = pneg %p45
    %p52 = scmp.eq.s32.totalorder %s10, 1
    %p53 = por %p51, %p52
    %p54 = scmp.ne.s32.totalorder %s46, %s49
    %p55 = scmp.eq.s32.totalorder %s10, 0
    %p56 = por %p54, %p55
    %p57 = scmp.ne.s32.totalorder %s46, %s49
    %p58 = scmp.eq.s32.totalorder %s15, 1
    %p59 = por %p57, %p58
    %p60 = scmp.ne.s32.totalorder %s49, %s50
    %p61 = scmp.eq.s32.totalorder %s15, 0
    %p62 = por %p60, %p61
    %p63 = scmp.ne.s32.totalorder %s49, %s50
    %p64 = scmp.eq.s32.totalorder %s16, 1
    %p65 = por %p63, %p64
    %p67 = scmp.ne.s32.totalorder %s50, %s66
    %p68 = scmp.eq.s32.totalorder %s16, 0
    %p69 = por %p67, %p68
    %s70 = ssub.s32 %s10, %s17
    %p71 = scmp.eq.s32.totalorder %s70, 0
    %s73 = sadd.s32 %s72, 1
    %s74 = scalar_select %p71, %s72, %s73
    %p77 = pneg %p71
    %p78 = scmp.eq.s32.totalorder %s10, 1
    %p79 = por %p77, %p78
    %p80 = scmp.ne.s32.totalorder %s72, %s75
    %p81 = scmp.eq.s32.totalorder %s10, 0
    %p82 = por %p80, %p81
    %p83 = scmp.ne.s32.totalorder %s72, %s75
    %p84 = scmp.eq.s32.totalorder %s15, 1
    %p85 = por %p83, %p84
    %p86 = scmp.ne.s32.totalorder %s75, %s76
    %p87 = scmp.eq.s32.totalorder %s15, 0
    %p88 = por %p86, %p87
    %p89 = scmp.ne.s32.totalorder %s75, %s76
    %p90 = scmp.eq.s32.totalorder %s16, 1
    %p91 = por %p89, %p90
    %p93 = scmp.ne.s32.totalorder %s76, %s92
    %p94 = scmp.eq.s32.totalorder %s16, 0
    %p95 = por %p93, %p94
    %s96 = ssub.s32 %s10, %s17
    %p97 = scmp.eq.s32.totalorder %s96, 0
    %s99 = sadd.s32 %s98, 1
    %s100 = scalar_select %p97, %s98, %s99
    %p103 = pneg %p97
    %p104 = scmp.eq.s32.totalorder %s10, 1
    %p105 = por %p103, %p104
    %p106 = scmp.ne.s32.totalorder %s98, %s101
    %p107 = scmp.eq.s32.totalorder %s10, 0
    %p108 = por %p106, %p107
    %p109 = scmp.ne.s32.totalorder %s98, %s101
    %p110 = scmp.eq.s32.totalorder %s15, 1
    %p111 = por %p109, %p110
    %p112 = scmp.ne.s32.totalorder %s101, %s102
    %p113 = scmp.eq.s32.totalorder %s15, 0
    %p114 = por %p112, %p113
    %p115 = scmp.ne.s32.totalorder %s101, %s102
    %p116 = scmp.eq.s32.totalorder %s16, 1
    %p117 = por %p115, %p116
    %p119 = scmp.ne.s32.totalorder %s102, %s118
    %p120 = scmp.eq.s32.totalorder %s16, 0
    %p121 = por %p119, %p120
    %s122 = ssub.s32 %s10, %s17
    %p123 = scmp.eq.s32.totalorder %s122, 0
    %s125 = sadd.s32 %s124, 1
    %s126 = scalar_select %p123, %s124, %s125
    %p129 = pneg %p123
    %p130 = scmp.eq.s32.totalorder %s10, 1
    %p131 = por %p129, %p130
    %p132 = scmp.ne.s32.totalorder %s124, %s127
    %p133 = scmp.eq.s32.totalorder %s10, 0
    %p134 = por %p132, %p133
    %p135 = scmp.ne.s32.totalorder %s124, %s127
    %p136 = scmp.eq.s32.totalorder %s15, 1
    %p137 = por %p135, %p136
    %p138 = scmp.ne.s32.totalorder %s127, %s128
    %p139 = scmp.eq.s32.totalorder %s15, 0
    %p140 = por %p138, %p139
    %p141 = scmp.ne.s32.totalorder %s127, %s128
    %p142 = scmp.eq.s32.totalorder %s16, 1
    %p143 = por %p141, %p142
    %p145 = scmp.ne.s32.totalorder %s128, %s144
    %p146 = scmp.eq.s32.totalorder %s16, 0
    %p147 = por %p145, %p146
    %p148 = scmp.le.s32.totalorder 1, %s10
    %p149 = scmp.lt.s32.totalorder %s10, 3
    %p150 = pnand %p148, %p149
    %p151 = pneg %p150
    // Predicated region
    $region9: #{tpu_custom_call.1} parent=5 // pred_check
      _
    $region10: #{tpu_custom_call.1} parent=5 // pred_check_branch
      %153 = sbr.rel (%p150) target = $region12
    $region11: #{tpu_custom_call.1} parent=5 // pred_region
      %s154 = ssub.s32 %s10, 1
    $region12: #{tpu_custom_call.1} parent=5 // pred_fallthru
      _
    %p155 = scmp.lt.s32.totalorder %s10, 2
    // Predicated region
    $region13: #{tpu_custom_call.1} parent=5 // pred_check
      %p156 = pneg %p155
    $region14: #{tpu_custom_call.1} parent=5 // pred_check_branch
      %158 = sbr.rel (%p156) target = $region16
    $region15: #{tpu_custom_call.1} parent=5 // pred_region
      // Predicated region
      $region17: #{tpu_custom_call.1} parent=15 // pred_check
        %p159 = pneg %p30
      $region18: #{tpu_custom_call.1} parent=15 // pred_check_branch
        %161 = sbr.rel (%p159) target = $region20
      $region19: #{tpu_custom_call.1} parent=15 // pred_region
        %s162 = smul.u32 2, %s10
        %p163 = scmp.lt.s32.totalorder %s162, 3
        %s164 = scalar_select %p163, %s162, 3
        %s165 = smul.addr %s164, 13
        %s166 = smul.addr %s165, 8
        %s167 = scalar_lea.vmem %s0, %s166
        %s168 = smul.u32 2, %s10
      $region20: #{tpu_custom_call.1} parent=15 // pred_fallthru
        _
      // Predicated region
      $region21: #{tpu_custom_call.1} parent=15 // pred_check
        %p169 = pneg %p56
      $region22: #{tpu_custom_call.1} parent=15 // pred_check_branch
        %171 = sbr.rel (%p169) target = $region24
      $region23: #{tpu_custom_call.1} parent=15 // pred_region
        %s172 = smul.u32 2, %s10
        %p173 = scmp.lt.s32.totalorder %s172, 3
        %s174 = scalar_select %p173, %s172, 3
        %s175 = smul.addr %s174, 13
        %s176 = smul.addr %s175, 8
        %s177 = scalar_lea.vmem %s1, %s176
        %s178 = smul.u32 2, %s10
      $region24: #{tpu_custom_call.1} parent=15 // pred_fallthru
        _
      // Predicated region
      $region25: #{tpu_custom_call.1} parent=15 // pred_check
        %p179 = pneg %p82
      $region26: #{tpu_custom_call.1} parent=15 // pred_check_branch
        %181 = sbr.rel (%p179) target = $region28
      $region27: #{tpu_custom_call.1} parent=15 // pred_region
        %s182 = smul.u32 2, %s10
        %p183 = scmp.lt.s32.totalorder %s182, 3
        %s184 = scalar_select %p183, %s182, 3
        %s185 = smul.addr %s184, 13
        %s186 = smul.addr %s185, 8
        %s187 = scalar_lea.vmem %s2, %s186
        %s188 = smul.u32 2, %s10
      $region28: #{tpu_custom_call.1} parent=15 // pred_fallthru
        _
      // Predicated region
      $region29: #{tpu_custom_call.1} parent=15 // pred_check
        %p189 = pneg %p108
      $region30: #{tpu_custom_call.1} parent=15 // pred_check_branch
        %191 = sbr.rel (%p189) target = $region32
      $region31: #{tpu_custom_call.1} parent=15 // pred_region
        %s192 = smul.u32 2, %s10
        %p193 = scmp.lt.s32.totalorder %s192, 3
        %s194 = scalar_select %p193, %s192, 3
        %s195 = scalar_lea.vmem %s3, %s194
        %s196 = smul.u32 2, %s10
      $region32: #{tpu_custom_call.1} parent=15 // pred_fallthru
        _
    $region16: #{tpu_custom_call.1} parent=5 // pred_fallthru
      _
    %p197 = scmp.le.s32.totalorder 1, %s10
    %p198 = scmp.lt.s32.totalorder %s10, 3
    %p199 = pnand %p197, %p198
    %p200 = pneg %p199
    // Predicated region
    $region33: #{tpu_custom_call.1} parent=5 // pred_check
      _
    $region34: #{tpu_custom_call.1} parent=5 // pred_check_branch
      %202 = sbr.rel (%p199) target = $region36
    $region35: #{tpu_custom_call.1} parent=5 // pred_region
      %s203 = ssub.s32 %s10, 1
      %s204 = smul.u32 2, %s15
      %p205 = scmp.lt.s32.totalorder %s204, 3
      %s206 = scalar_select %p205, %s204, 3
      %s207 = smul.addr %s206, 13
      %s208 = smul.addr %s207, 8
      %s209 = scalar_lea.vmem %s0, %s208
      %p210 = pneg %p36
      %p211 = pneg %p33
      %s212 = smul.u32 2, %s15
      %p213 = scmp.lt.s32.totalorder %s212, 3
      %s214 = scalar_select %p213, %s212, 3
      %s215 = smul.addr %s214, 13
      %s216 = smul.addr %s215, 8
      %s217 = scalar_lea.vmem %s1, %s216
      %p218 = pneg %p62
      %p219 = pneg %p59
      %s220 = smul.u32 2, %s15
      %p221 = scmp.lt.s32.totalorder %s220, 3
      %s222 = scalar_select %p221, %s220, 3
      %s223 = smul.addr %s222, 13
      %s224 = smul.addr %s223, 8
      %s225 = scalar_lea.vmem %s2, %s224
      %p226 = pneg %p88
      %p227 = pneg %p85
      %s228 = smul.u32 2, %s15
      %p229 = scmp.lt.s32.totalorder %s228, 3
      %s230 = scalar_select %p229, %s228, 3
      %s231 = scalar_lea.vmem %s3, %s230
      %p232 = pneg %p114
      %p233 = pneg %p111
      %p234 = pneg %p140
      %p235 = pneg %p137
      %s236 = smul.u32 2, %s15
      %p237 = scmp.lt.s32.totalorder %s236, 3
      %s238 = scalar_select %p237, %s236, 3
      %s239 = smul.addr %s238, 13
      %s240 = smul.addr %s239, 8
      %s241 = scalar_lea.vmem %s4, %s240
      %s242 = smul.u32 2, %s15
      %p243 = scmp.lt.s32.totalorder %s242, 3
      %s244 = scalar_select %p243, %s242, 3
      %s245 = smul.addr %s244, 13
      %s246 = smul.addr %s245, 8
      %s247 = scalar_lea.vmem %s0, %s246
      %s248 = smul.u32 2, %s15
      %s249 = smul.u32 2, %s15
      %p250 = scmp.lt.s32.totalorder %s249, 3
      %s251 = scalar_select %p250, %s249, 3
      %s252 = smul.addr %s251, 13
      %s253 = smul.addr %s252, 8
      %s254 = scalar_lea.vmem %s1, %s253
      %s255 = smul.u32 2, %s15
      %s256 = smul.u32 2, %s15
      %p257 = scmp.lt.s32.totalorder %s256, 3
      %s258 = scalar_select %p257, %s256, 3
      %s259 = smul.addr %s258, 13
      %s260 = smul.addr %s259, 8
      %s261 = scalar_lea.vmem %s2, %s260
      %s262 = smul.u32 2, %s15
      %s263 = smul.u32 2, %s15
      %p264 = scmp.lt.s32.totalorder %s263, 3
      %s265 = scalar_select %p264, %s263, 3
      %s266 = scalar_lea.vmem %s3, %s265
      %s267 = smul.u32 2, %s15
      %s268 = smul.u32 2, %s15
      %p269 = scmp.lt.s32.totalorder %s268, 3
      %s270 = scalar_select %p269, %s268, 3
      %s271 = smul.addr %s270, 13
      %s272 = smul.addr %s271, 8
      %s273 = scalar_lea.vmem %s4, %s272
      %s274 = smul.u32 2, %s15
      %v275 = vld [vmem:[%s247] sm:$0xff]
      %v276 = vld [vmem:[%s247 + $0x8] sm:$0xff]
      %v277 = vld [vmem:[%s247 + $0x10] sm:$0xff]
      %v278 = vld [vmem:[%s247 + $0x18] sm:$0xff]
      %v279 = vld [vmem:[%s247 + $0x20] sm:$0xff]
      %v280 = vld [vmem:[%s247 + $0x28] sm:$0xff]
      %v281 = vld [vmem:[%s247 + $0x30] sm:$0xff]
      %v282 = vld [vmem:[%s247 + $0x38] sm:$0xff]
      %v283 = vld [vmem:[%s247 + $0x40] sm:$0xff]
      %v284 = vld [vmem:[%s247 + $0x48] sm:$0xff]
      %v285 = vld [vmem:[%s247 + $0x50] sm:$0xff]
      %v286 = vld [vmem:[%s247 + $0x58] sm:$0xff]
      %v287 = vld [vmem:[%s247 + $0x60] sm:$0xf]
      %v288 = vld [vmem:[%s247 + $0x68] sm:$0xff]
      %v289 = vld [vmem:[%s247 + $0x70] sm:$0xff]
      %v290 = vld [vmem:[%s247 + $0x78] sm:$0xff]
      %v291 = vld [vmem:[%s247 + $0x80] sm:$0xff]
      %v292 = vld [vmem:[%s247 + $0x88] sm:$0xff]
      %v293 = vld [vmem:[%s247 + $0x90] sm:$0xff]
      %v294 = vld [vmem:[%s247 + $0x98] sm:$0xff]
      %v295 = vld [vmem:[%s247 + $0xa0] sm:$0xff]
      %v296 = vld [vmem:[%s247 + $0xa8] sm:$0xff]
      %v297 = vld [vmem:[%s247 + $0xb0] sm:$0xff]
      %v298 = vld [vmem:[%s247 + $0xb8] sm:$0xff]
      %v299 = vld [vmem:[%s247 + $0xc0] sm:$0xff]
      %v300 = vld [vmem:[%s247 + $0xc8] sm:$0xf]
      %v301 = vlaneseq
      %v302 = vand.u32 %v301, 127
      %vm303 = vcmp.lt.s32.totalorder %v302, 4
      %v304 = vsel %vm303, -inf, 0.0
      %v305 = vadd.f32 %v275, %v304
      %v306 = vadd.f32 %v276, %v304
      %v307 = vadd.f32 %v277, %v304
      %v308 = vadd.f32 %v278, %v304
      %v309 = vadd.f32 %v279, %v304
      %v310 = vadd.f32 %v280, %v304
      %v311 = vadd.f32 %v281, %v304
      %v312 = vadd.f32 %v282, %v304
      %v313 = vadd.f32 %v283, %v304
      %v314 = vadd.f32 %v284, %v304
      %v315 = vadd.f32 %v285, %v304
      %v316 = vadd.f32 %v286, %v304
      %v317 = vadd.f32 %v287, %v304
      %v318 = vadd.f32 %v288, %v304
      %v319 = vadd.f32 %v289, %v304
      %v320 = vadd.f32 %v290, %v304
      %v321 = vadd.f32 %v291, %v304
      %v322 = vadd.f32 %v292, %v304
      %v323 = vadd.f32 %v293, %v304
      %v324 = vadd.f32 %v294, %v304
      %v325 = vadd.f32 %v295, %v304
      %v326 = vadd.f32 %v296, %v304
      %v327 = vadd.f32 %v297, %v304
      %v328 = vadd.f32 %v298, %v304
      %v329 = vadd.f32 %v299, %v304
      %v330 = vadd.f32 %v300, %v304
      %vm331 = vcmask 261120
      %v332 = vsel %vm331, %v305, -inf
      %333 = vmax.xlane.f32.xlu0 %v332
      %v334 = vpop.xlane.xlu0 %333
      %v335 = vsel %vm331, %v306, -inf
      %336 = vmax.xlane.f32.xlu0 %v335
      %v337 = vpop.xlane.xlu0 %336
      %v338 = vsel %vm331, %v307, -inf
      %339 = vmax.xlane.f32.xlu0 %v338
      %v340 = vpop.xlane.xlu0 %339
      %v341 = vsel %vm331, %v308, -inf
      %342 = vmax.xlane.f32.xlu0 %v341
      %v343 = vpop.xlane.xlu0 %342
      %v344 = vsel %vm331, %v309, -inf
      %345 = vmax.xlane.f32.xlu0 %v344
      %v346 = vpop.xlane.xlu0 %345
      %v347 = vsel %vm331, %v310, -inf
      %348 = vmax.xlane.f32.xlu0 %v347
      %v349 = vpop.xlane.xlu0 %348
      %v350 = vsel %vm331, %v311, -inf
      %351 = vmax.xlane.f32.xlu0 %v350
      %v352 = vpop.xlane.xlu0 %351
      %v353 = vsel %vm331, %v312, -inf
      %354 = vmax.xlane.f32.xlu0 %v353
      %v355 = vpop.xlane.xlu0 %354
      %v356 = vsel %vm331, %v313, -inf
      %357 = vmax.xlane.f32.xlu0 %v356
      %v358 = vpop.xlane.xlu0 %357
      %v359 = vsel %vm331, %v314, -inf
      %360 = vmax.xlane.f32.xlu0 %v359
      %v361 = vpop.xlane.xlu0 %360
      %v362 = vsel %vm331, %v315, -inf
      %363 = vmax.xlane.f32.xlu0 %v362
      %v364 = vpop.xlane.xlu0 %363
      %v365 = vsel %vm331, %v316, -inf
      %366 = vmax.xlane.f32.xlu0 %v365
      %v367 = vpop.xlane.xlu0 %366
      %vm368 = vcmask 257024
      %v369 = vsel %vm368, %v317, -inf
      %370 = vmax.xlane.f32.xlu0 %v369
      %v371 = vpop.xlane.xlu0 %370
      %v372 = vsel %vm331, %v318, -inf
      %373 = vmax.xlane.f32.xlu0 %v372
      %v374 = vpop.xlane.xlu0 %373
      %v375 = vsel %vm331, %v319, -inf
      %376 = vmax.xlane.f32.xlu0 %v375
      %v377 = vpop.xlane.xlu0 %376
      %v378 = vsel %vm331, %v320, -inf
      %379 = vmax.xlane.f32.xlu0 %v378
      %v380 = vpop.xlane.xlu0 %379
      %v381 = vsel %vm331, %v321, -inf
      %382 = vmax.xlane.f32.xlu0 %v381
      %v383 = vpop.xlane.xlu0 %382
      %v384 = vsel %vm331, %v322, -inf
      %385 = vmax.xlane.f32.xlu0 %v384
      %v386 = vpop.xlane.xlu0 %385
      %v387 = vsel %vm331, %v323, -inf
      %388 = vmax.xlane.f32.xlu0 %v387
      %v389 = vpop.xlane.xlu0 %388
      %v390 = vsel %vm331, %v324, -inf
      %391 = vmax.xlane.f32.xlu0 %v390
      %v392 = vpop.xlane.xlu0 %391
      %v393 = vsel %vm331, %v325, -inf
      %394 = vmax.xlane.f32.xlu0 %v393
      %v395 = vpop.xlane.xlu0 %394
      %v396 = vsel %vm331, %v326, -inf
      %397 = vmax.xlane.f32.xlu0 %v396
      %v398 = vpop.xlane.xlu0 %397
      %v399 = vsel %vm331, %v327, -inf
      %400 = vmax.xlane.f32.xlu0 %v399
      %v401 = vpop.xlane.xlu0 %400
      %v402 = vsel %vm331, %v328, -inf
      %403 = vmax.xlane.f32.xlu0 %v402
      %v404 = vpop.xlane.xlu0 %403
      %v405 = vsel %vm331, %v329, -inf
      %406 = vmax.xlane.f32.xlu0 %v405
      %v407 = vpop.xlane.xlu0 %406
      %v408 = vsel %vm368, %v330, -inf
      %409 = vmax.xlane.f32.xlu0 %v408
      %v410 = vpop.xlane.xlu0 %409
      %v411 = vsub.f32 %v305, %v334
      %v412 = vsub.f32 %v306, %v337
      %v413 = vsub.f32 %v307, %v340
      %v414 = vsub.f32 %v308, %v343
      %v415 = vsub.f32 %v309, %v346
      %v416 = vsub.f32 %v310, %v349
      %v417 = vsub.f32 %v311, %v352
      %v418 = vsub.f32 %v312, %v355
      %v419 = vsub.f32 %v313, %v358
      %v420 = vsub.f32 %v314, %v361
      %v421 = vsub.f32 %v315, %v364
      %v422 = vsub.f32 %v316, %v367
      %v423 = vsub.f32 %v317, %v371
      %v424 = vsub.f32 %v318, %v374
      %v425 = vsub.f32 %v319, %v377
      %v426 = vsub.f32 %v320, %v380
      %v427 = vsub.f32 %v321, %v383
      %v428 = vsub.f32 %v322, %v386
      %v429 = vsub.f32 %v323, %v389
      %v430 = vsub.f32 %v324, %v392
      %v431 = vsub.f32 %v325, %v395
      %v432 = vsub.f32 %v326, %v398
      %v433 = vsub.f32 %v327, %v401
      %v434 = vsub.f32 %v328, %v404
      %v435 = vsub.f32 %v329, %v407
      %v436 = vsub.f32 %v330, %v410
      %v437 = vmul.f32 %v411, 1.442695
      %v438 = vpow.pop %v437
      %v439 = vmul.f32 %v412, 1.442695
      %v440 = vpow.pop %v439
      %v441 = vmul.f32 %v413, 1.442695
      %v442 = vpow.pop %v441
      %v443 = vmul.f32 %v414, 1.442695
      %v444 = vpow.pop %v443
      %v445 = vmul.f32 %v415, 1.442695
      %v446 = vpow.pop %v445
      %v447 = vmul.f32 %v416, 1.442695
      %v448 = vpow.pop %v447
      %v449 = vmul.f32 %v417, 1.442695
      %v450 = vpow.pop %v449
      %v451 = vmul.f32 %v418, 1.442695
      %v452 = vpow.pop %v451
      %v453 = vmul.f32 %v419, 1.442695
      %v454 = vpow.pop %v453
      %v455 = vmul.f32 %v420, 1.442695
      %v456 = vpow.pop %v455
      %v457 = vmul.f32 %v421, 1.442695
      %v458 = vpow.pop %v457
      %v459 = vmul.f32 %v422, 1.442695
      %v460 = vpow.pop %v459
      %v461 = vmul.f32 %v423, 1.442695
      %v462 = vpow.pop %v461
      %v463 = vmul.f32 %v424, 1.442695
      %v464 = vpow.pop %v463
      %v465 = vmul.f32 %v425, 1.442695
      %v466 = vpow.pop %v465
      %v467 = vmul.f32 %v426, 1.442695
      %v468 = vpow.pop %v467
      %v469 = vmul.f32 %v427, 1.442695
      %v470 = vpow.pop %v469
      %v471 = vmul.f32 %v428, 1.442695
      %v472 = vpow.pop %v471
      %v473 = vmul.f32 %v429, 1.442695
      %v474 = vpow.pop %v473
      %v475 = vmul.f32 %v430, 1.442695
      %v476 = vpow.pop %v475
      %v477 = vmul.f32 %v431, 1.442695
      %v478 = vpow.pop %v477
      %v479 = vmul.f32 %v432, 1.442695
      %v480 = vpow.pop %v479
      %v481 = vmul.f32 %v433, 1.442695
      %v482 = vpow.pop %v481
      %v483 = vmul.f32 %v434, 1.442695
      %v484 = vpow.pop %v483
      %v485 = vmul.f32 %v435, 1.442695
      %v486 = vpow.pop %v485
      %v487 = vmul.f32 %v436, 1.442695
      %v488 = vpow.pop %v487
      %v489 = vsel %vm331, %v438, 0.0
      %490 = vadd.xlane.f32.xlu0 %v489
      %v491 = vpop.xlane.xlu0 %490
      %v492 = vsel %vm331, %v440, 0.0
      %493 = vadd.xlane.f32.xlu0 %v492
      %v494 = vpop.xlane.xlu0 %493
      %v495 = vsel %vm331, %v442, 0.0
      %496 = vadd.xlane.f32.xlu0 %v495
      %v497 = vpop.xlane.xlu0 %496
      %v498 = vsel %vm331, %v444, 0.0
      %499 = vadd.xlane.f32.xlu0 %v498
      %v500 = vpop.xlane.xlu0 %499
      %v501 = vsel %vm331, %v446, 0.0
      %502 = vadd.xlane.f32.xlu0 %v501
      %v503 = vpop.xlane.xlu0 %502
      %v504 = vsel %vm331, %v448, 0.0
      %505 = vadd.xlane.f32.xlu0 %v504
      %v506 = vpop.xlane.xlu0 %505
      %v507 = vsel %vm331, %v450, 0.0
      %508 = vadd.xlane.f32.xlu0 %v507
      %v509 = vpop.xlane.xlu0 %508
      %v510 = vsel %vm331, %v452, 0.0
      %511 = vadd.xlane.f32.xlu0 %v510
      %v512 = vpop.xlane.xlu0 %511
      %v513 = vsel %vm331, %v454, 0.0
      %514 = vadd.xlane.f32.xlu0 %v513
      %v515 = vpop.xlane.xlu0 %514
      %v516 = vsel %vm331, %v456, 0.0
      %517 = vadd.xlane.f32.xlu0 %v516
      %v518 = vpop.xlane.xlu0 %517
      %v519 = vsel %vm331, %v458, 0.0
      %520 = vadd.xlane.f32.xlu0 %v519
      %v521 = vpop.xlane.xlu0 %520
      %v522 = vsel %vm331, %v460, 0.0
      %523 = vadd.xlane.f32.xlu0 %v522
      %v524 = vpop.xlane.xlu0 %523
      %v525 = vsel %vm368, %v462, 0.0
      %526 = vadd.xlane.f32.xlu0 %v525
      %v527 = vpop.xlane.xlu0 %526
      %v528 = vsel %vm331, %v464, 0.0
      %529 = vadd.xlane.f32.xlu0 %v528
      %v530 = vpop.xlane.xlu0 %529
      %v531 = vsel %vm331, %v466, 0.0
      %532 = vadd.xlane.f32.xlu0 %v531
      %v533 = vpop.xlane.xlu0 %532
      %v534 = vsel %vm331, %v468, 0.0
      %535 = vadd.xlane.f32.xlu0 %v534
      %v536 = vpop.xlane.xlu0 %535
      %v537 = vsel %vm331, %v470, 0.0
      %538 = vadd.xlane.f32.xlu0 %v537
      %v539 = vpop.xlane.xlu0 %538
      %v540 = vsel %vm331, %v472, 0.0
      %541 = vadd.xlane.f32.xlu0 %v540
      %v542 = vpop.xlane.xlu0 %541
      %v543 = vsel %vm331, %v474, 0.0
      %544 = vadd.xlane.f32.xlu0 %v543
      %v545 = vpop.xlane.xlu0 %544
      %v546 = vsel %vm331, %v476, 0.0
      %547 = vadd.xlane.f32.xlu0 %v546
      %v548 = vpop.xlane.xlu0 %547
      %v549 = vsel %vm331, %v478, 0.0
      %550 = vadd.xlane.f32.xlu0 %v549
      %v551 = vpop.xlane.xlu0 %550
      %v552 = vsel %vm331, %v480, 0.0
      %553 = vadd.xlane.f32.xlu0 %v552
      %v554 = vpop.xlane.xlu0 %553
      %v555 = vsel %vm331, %v482, 0.0
      %556 = vadd.xlane.f32.xlu0 %v555
      %v557 = vpop.xlane.xlu0 %556
      %v558 = vsel %vm331, %v484, 0.0
      %559 = vadd.xlane.f32.xlu0 %v558
      %v560 = vpop.xlane.xlu0 %559
      %v561 = vsel %vm331, %v486, 0.0
      %562 = vadd.xlane.f32.xlu0 %v561
      %v563 = vpop.xlane.xlu0 %562
      %v564 = vsel %vm368, %v488, 0.0
      %565 = vadd.xlane.f32.xlu0 %v564
      %v566 = vpop.xlane.xlu0 %565
      %v567 = vrcp.pop %v491
      %v568 = vmul.f32 %v491, %v567
      %v569 = vsub.f32 1.0, %v568
      %v570 = vmul.f32 %v567, %v569
      %v571 = vadd.f32 %v567, %v570
      %vm572 = vweird.f32 %v491
      %vm573 = vweird.f32 %v567
      %vm574 = vmor %vm572, %vm573
      %v575 = vsel %vm574, %v567, %v571
      %v576 = vand.u32 2147483647, %v491
      %vm577 = vcmp.eq.f32.partialorder %v576, 8.507059e+37
      %v578 = vand.u32 %v491, 2147483648
      %v579 = vor.u32 1.1754944e-38, %v578
      %v580 = vsel %vm577, %v579, %v575
      %v581 = vrcp.pop %v494
      %v582 = vmul.f32 %v494, %v581
      %v583 = vsub.f32 1.0, %v582
      %v584 = vmul.f32 %v581, %v583
      %v585 = vadd.f32 %v581, %v584
      %vm586 = vweird.f32 %v494
      %vm587 = vweird.f32 %v581
      %vm588 = vmor %vm586, %vm587
      %v589 = vsel %vm588, %v581, %v585
      %v590 = vand.u32 2147483647, %v494
      %vm591 = vcmp.eq.f32.partialorder %v590, 8.507059e+37
      %v592 = vand.u32 %v494, 2147483648
      %v593 = vor.u32 1.1754944e-38, %v592
      %v594 = vsel %vm591, %v593, %v589
      %v595 = vrcp.pop %v497
      %v596 = vmul.f32 %v497, %v595
      %v597 = vsub.f32 1.0, %v596
      %v598 = vmul.f32 %v595, %v597
      %v599 = vadd.f32 %v595, %v598
      %vm600 = vweird.f32 %v497
      %vm601 = vweird.f32 %v595
      %vm602 = vmor %vm600, %vm601
      %v603 = vsel %vm602, %v595, %v599
      %v604 = vand.u32 2147483647, %v497
      %vm605 = vcmp.eq.f32.partialorder %v604, 8.507059e+37
      %v606 = vand.u32 %v497, 2147483648
      %v607 = vor.u32 1.1754944e-38, %v606
      %v608 = vsel %vm605, %v607, %v603
      %v609 = vrcp.pop %v500
      %v610 = vmul.f32 %v500, %v609
      %v611 = vsub.f32 1.0, %v610
      %v612 = vmul.f32 %v609, %v611
      %v613 = vadd.f32 %v609, %v612
      %vm614 = vweird.f32 %v500
      %vm615 = vweird.f32 %v609
      %vm616 = vmor %vm614, %vm615
      %v617 = vsel %vm616, %v609, %v613
      %v618 = vand.u32 2147483647, %v500
      %vm619 = vcmp.eq.f32.partialorder %v618, 8.507059e+37
      %v620 = vand.u32 %v500, 2147483648
      %v621 = vor.u32 1.1754944e-38, %v620
      %v622 = vsel %vm619, %v621, %v617
      %v623 = vrcp.pop %v503
      %v624 = vmul.f32 %v503, %v623
      %v625 = vsub.f32 1.0, %v624
      %v626 = vmul.f32 %v623, %v625
      %v627 = vadd.f32 %v623, %v626
      %vm628 = vweird.f32 %v503
      %vm629 = vweird.f32 %v623
      %vm630 = vmor %vm628, %vm629
      %v631 = vsel %vm630, %v623, %v627
      %v632 = vand.u32 2147483647, %v503
      %vm633 = vcmp.eq.f32.partialorder %v632, 8.507059e+37
      %v634 = vand.u32 %v503, 2147483648
      %v635 = vor.u32 1.1754944e-38, %v634
      %v636 = vsel %vm633, %v635, %v631
      %v637 = vrcp.pop %v506
      %v638 = vmul.f32 %v506, %v637
      %v639 = vsub.f32 1.0, %v638
      %v640 = vmul.f32 %v637, %v639
      %v641 = vadd.f32 %v637, %v640
      %vm642 = vweird.f32 %v506
      %vm643 = vweird.f32 %v637
      %vm644 = vmor %vm642, %vm643
      %v645 = vsel %vm644, %v637, %v641
      %v646 = vand.u32 2147483647, %v506
      %vm647 = vcmp.eq.f32.partialorder %v646, 8.507059e+37
      %v648 = vand.u32 %v506, 2147483648
      %v649 = vor.u32 1.1754944e-38, %v648
      %v650 = vsel %vm647, %v649, %v645
      %v651 = vrcp.pop %v509
      %v652 = vmul.f32 %v509, %v651
      %v653 = vsub.f32 1.0, %v652
      %v654 = vmul.f32 %v651, %v653
      %v655 = vadd.f32 %v651, %v654
      %vm656 = vweird.f32 %v509
      %vm657 = vweird.f32 %v651
      %vm658 = vmor %vm656, %vm657
      %v659 = vsel %vm658, %v651, %v655
      %v660 = vand.u32 2147483647, %v509
      %vm661 = vcmp.eq.f32.partialorder %v660, 8.507059e+37
      %v662 = vand.u32 %v509, 2147483648
      %v663 = vor.u32 1.1754944e-38, %v662
      %v664 = vsel %vm661, %v663, %v659
      %v665 = vrcp.pop %v512
      %v666 = vmul.f32 %v512, %v665
      %v667 = vsub.f32 1.0, %v666
      %v668 = vmul.f32 %v665, %v667
      %v669 = vadd.f32 %v665, %v668
      %vm670 = vweird.f32 %v512
      %vm671 = vweird.f32 %v665
      %vm672 = vmor %vm670, %vm671
      %v673 = vsel %vm672, %v665, %v669
      %v674 = vand.u32 2147483647, %v512
      %vm675 = vcmp.eq.f32.partialorder %v674, 8.507059e+37
      %v676 = vand.u32 %v512, 2147483648
      %v677 = vor.u32 1.1754944e-38, %v676
      %v678 = vsel %vm675, %v677, %v673
      %v679 = vrcp.pop %v515
      %v680 = vmul.f32 %v515, %v679
      %v681 = vsub.f32 1.0, %v680
      %v682 = vmul.f32 %v679, %v681
      %v683 = vadd.f32 %v679, %v682
      %vm684 = vweird.f32 %v515
      %vm685 = vweird.f32 %v679
      %vm686 = vmor %vm684, %vm685
      %v687 = vsel %vm686, %v679, %v683
      %v688 = vand.u32 2147483647, %v515
      %vm689 = vcmp.eq.f32.partialorder %v688, 8.507059e+37
      %v690 = vand.u32 %v515, 2147483648
      %v691 = vor.u32 1.1754944e-38, %v690
      %v692 = vsel %vm689, %v691, %v687
      %v693 = vrcp.pop %v518
      %v694 = vmul.f32 %v518, %v693
      %v695 = vsub.f32 1.0, %v694
      %v696 = vmul.f32 %v693, %v695
      %v697 = vadd.f32 %v693, %v696
      %vm698 = vweird.f32 %v518
      %vm699 = vweird.f32 %v693
      %vm700 = vmor %vm698, %vm699
      %v701 = vsel %vm700, %v693, %v697
      %v702 = vand.u32 2147483647, %v518
      %vm703 = vcmp.eq.f32.partialorder %v702, 8.507059e+37
      %v704 = vand.u32 %v518, 2147483648
      %v705 = vor.u32 1.1754944e-38, %v704
      %v706 = vsel %vm703, %v705, %v701
      %v707 = vrcp.pop %v521
      %v708 = vmul.f32 %v521, %v707
      %v709 = vsub.f32 1.0, %v708
      %v710 = vmul.f32 %v707, %v709
      %v711 = vadd.f32 %v707, %v710
      %vm712 = vweird.f32 %v521
      %vm713 = vweird.f32 %v707
      %vm714 = vmor %vm712, %vm713
      %v715 = vsel %vm714, %v707, %v711
      %v716 = vand.u32 2147483647, %v521
      %vm717 = vcmp.eq.f32.partialorder %v716, 8.507059e+37
      %v718 = vand.u32 %v521, 2147483648
      %v719 = vor.u32 1.1754944e-38, %v718
      %v720 = vsel %vm717, %v719, %v715
      %v721 = vrcp.pop %v524
      %v722 = vmul.f32 %v524, %v721
      %v723 = vsub.f32 1.0, %v722
      %v724 = vmul.f32 %v721, %v723
      %v725 = vadd.f32 %v721, %v724
      %vm726 = vweird.f32 %v524
      %vm727 = vweird.f32 %v721
      %vm728 = vmor %vm726, %vm727
      %v729 = vsel %vm728, %v721, %v725
      %v730 = vand.u32 2147483647, %v524
      %vm731 = vcmp.eq.f32.partialorder %v730, 8.507059e+37
      %v732 = vand.u32 %v524, 2147483648
      %v733 = vor.u32 1.1754944e-38, %v732
      %v734 = vsel %vm731, %v733, %v729
      %v735 = vrcp.pop %v527
      %v736 = vmul.f32 %v527, %v735
      %v737 = vsub.f32 1.0, %v736
      %v738 = vmul.f32 %v735, %v737
      %v739 = vadd.f32 %v735, %v738
      %vm740 = vweird.f32 %v527
      %vm741 = vweird.f32 %v735
      %vm742 = vmor %vm740, %vm741
      %v743 = vsel %vm742, %v735, %v739
      %v744 = vand.u32 2147483647, %v527
      %vm745 = vcmp.eq.f32.partialorder %v744, 8.507059e+37
      %v746 = vand.u32 %v527, 2147483648
      %v747 = vor.u32 1.1754944e-38, %v746
      %v748 = vsel %vm745, %v747, %v743
      %v749 = vrcp.pop %v530
      %v750 = vmul.f32 %v530, %v749
      %v751 = vsub.f32 1.0, %v750
      %v752 = vmul.f32 %v749, %v751
      %v753 = vadd.f32 %v749, %v752
      %vm754 = vweird.f32 %v530
      %vm755 = vweird.f32 %v749
      %vm756 = vmor %vm754, %vm755
      %v757 = vsel %vm756, %v749, %v753
      %v758 = vand.u32 2147483647, %v530
      %vm759 = vcmp.eq.f32.partialorder %v758, 8.507059e+37
      %v760 = vand.u32 %v530, 2147483648
      %v761 = vor.u32 1.1754944e-38, %v760
      %v762 = vsel %vm759, %v761, %v757
      %v763 = vrcp.pop %v533
      %v764 = vmul.f32 %v533, %v763
      %v765 = vsub.f32 1.0, %v764
      %v766 = vmul.f32 %v763, %v765
      %v767 = vadd.f32 %v763, %v766
      %vm768 = vweird.f32 %v533
      %vm769 = vweird.f32 %v763
      %vm770 = vmor %vm768, %vm769
      %v771 = vsel %vm770, %v763, %v767
      %v772 = vand.u32 2147483647, %v533
      %vm773 = vcmp.eq.f32.partialorder %v772, 8.507059e+37
      %v774 = vand.u32 %v533, 2147483648
      %v775 = vor.u32 1.1754944e-38, %v774
      %v776 = vsel %vm773, %v775, %v771
      %v777 = vrcp.pop %v536
      %v778 = vmul.f32 %v536, %v777
      %v779 = vsub.f32 1.0, %v778
      %v780 = vmul.f32 %v777, %v779
      %v781 = vadd.f32 %v777, %v780
      %vm782 = vweird.f32 %v536
      %vm783 = vweird.f32 %v777
      %vm784 = vmor %vm782, %vm783
      %v785 = vsel %vm784, %v777, %v781
      %v786 = vand.u32 2147483647, %v536
      %vm787 = vcmp.eq.f32.partialorder %v786, 8.507059e+37
      %v788 = vand.u32 %v536, 2147483648
      %v789 = vor.u32 1.1754944e-38, %v788
      %v790 = vsel %vm787, %v789, %v785
      %v791 = vrcp.pop %v539
      %v792 = vmul.f32 %v539, %v791
      %v793 = vsub.f32 1.0, %v792
      %v794 = vmul.f32 %v791, %v793
      %v795 = vadd.f32 %v791, %v794
      %vm796 = vweird.f32 %v539
      %vm797 = vweird.f32 %v791
      %vm798 = vmor %vm796, %vm797
      %v799 = vsel %vm798, %v791, %v795
      %v800 = vand.u32 2147483647, %v539
      %vm801 = vcmp.eq.f32.partialorder %v800, 8.507059e+37
      %v802 = vand.u32 %v539, 2147483648
      %v803 = vor.u32 1.1754944e-38, %v802
      %v804 = vsel %vm801, %v803, %v799
      %v805 = vrcp.pop %v542
      %v806 = vmul.f32 %v542, %v805
      %v807 = vsub.f32 1.0, %v806
      %v808 = vmul.f32 %v805, %v807
      %v809 = vadd.f32 %v805, %v808
      %vm810 = vweird.f32 %v542
      %vm811 = vweird.f32 %v805
      %vm812 = vmor %vm810, %vm811
      %v813 = vsel %vm812, %v805, %v809
      %v814 = vand.u32 2147483647, %v542
      %vm815 = vcmp.eq.f32.partialorder %v814, 8.507059e+37
      %v816 = vand.u32 %v542, 2147483648
      %v817 = vor.u32 1.1754944e-38, %v816
      %v818 = vsel %vm815, %v817, %v813
      %v819 = vrcp.pop %v545
      %v820 = vmul.f32 %v545, %v819
      %v821 = vsub.f32 1.0, %v820
      %v822 = vmul.f32 %v819, %v821
      %v823 = vadd.f32 %v819, %v822
      %vm824 = vweird.f32 %v545
      %vm825 = vweird.f32 %v819
      %vm826 = vmor %vm824, %vm825
      %v827 = vsel %vm826, %v819, %v823
      %v828 = vand.u32 2147483647, %v545
      %vm829 = vcmp.eq.f32.partialorder %v828, 8.507059e+37
      %v830 = vand.u32 %v545, 2147483648
      %v831 = vor.u32 1.1754944e-38, %v830
      %v832 = vsel %vm829, %v831, %v827
      %v833 = vrcp.pop %v548
      %v834 = vmul.f32 %v548, %v833
      %v835 = vsub.f32 1.0, %v834
      %v836 = vmul.f32 %v833, %v835
      %v837 = vadd.f32 %v833, %v836
      %vm838 = vweird.f32 %v548
      %vm839 = vweird.f32 %v833
      %vm840 = vmor %vm838, %vm839
      %v841 = vsel %vm840, %v833, %v837
      %v842 = vand.u32 2147483647, %v548
      %vm843 = vcmp.eq.f32.partialorder %v842, 8.507059e+37
      %v844 = vand.u32 %v548, 2147483648
      %v845 = vor.u32 1.1754944e-38, %v844
      %v846 = vsel %vm843, %v845, %v841
      %v847 = vrcp.pop %v551
      %v848 = vmul.f32 %v551, %v847
      %v849 = vsub.f32 1.0, %v848
      %v850 = vmul.f32 %v847, %v849
      %v851 = vadd.f32 %v847, %v850
      %vm852 = vweird.f32 %v551
      %vm853 = vweird.f32 %v847
      %vm854 = vmor %vm852, %vm853
      %v855 = vsel %vm854, %v847, %v851
      %v856 = vand.u32 2147483647, %v551
      %vm857 = vcmp.eq.f32.partialorder %v856, 8.507059e+37
      %v858 = vand.u32 %v551, 2147483648
      %v859 = vor.u32 1.1754944e-38, %v858
      %v860 = vsel %vm857, %v859, %v855
      %v861 = vrcp.pop %v554
      %v862 = vmul.f32 %v554, %v861
      %v863 = vsub.f32 1.0, %v862
      %v864 = vmul.f32 %v861, %v863
      %v865 = vadd.f32 %v861, %v864
      %vm866 = vweird.f32 %v554
      %vm867 = vweird.f32 %v861
      %vm868 = vmor %vm866, %vm867
      %v869 = vsel %vm868, %v861, %v865
      %v870 = vand.u32 2147483647, %v554
      %vm871 = vcmp.eq.f32.partialorder %v870, 8.507059e+37
      %v872 = vand.u32 %v554, 2147483648
      %v873 = vor.u32 1.1754944e-38, %v872
      %v874 = vsel %vm871, %v873, %v869
      %v875 = vrcp.pop %v557
      %v876 = vmul.f32 %v557, %v875
      %v877 = vsub.f32 1.0, %v876
      %v878 = vmul.f32 %v875, %v877
      %v879 = vadd.f32 %v875, %v878
      %vm880 = vweird.f32 %v557
      %vm881 = vweird.f32 %v875
      %vm882 = vmor %vm880, %vm881
      %v883 = vsel %vm882, %v875, %v879
      %v884 = vand.u32 2147483647, %v557
      %vm885 = vcmp.eq.f32.partialorder %v884, 8.507059e+37
      %v886 = vand.u32 %v557, 2147483648
      %v887 = vor.u32 1.1754944e-38, %v886
      %v888 = vsel %vm885, %v887, %v883
      %v889 = vrcp.pop %v560
      %v890 = vmul.f32 %v560, %v889
      %v891 = vsub.f32 1.0, %v890
      %v892 = vmul.f32 %v889, %v891
      %v893 = vadd.f32 %v889, %v892
      %vm894 = vweird.f32 %v560
      %vm895 = vweird.f32 %v889
      %vm896 = vmor %vm894, %vm895
      %v897 = vsel %vm896, %v889, %v893
      %v898 = vand.u32 2147483647, %v560
      %vm899 = vcmp.eq.f32.partialorder %v898, 8.507059e+37
      %v900 = vand.u32 %v560, 2147483648
      %v901 = vor.u32 1.1754944e-38, %v900
      %v902 = vsel %vm899, %v901, %v897
      %v903 = vrcp.pop %v563
      %v904 = vmul.f32 %v563, %v903
      %v905 = vsub.f32 1.0, %v904
      %v906 = vmul.f32 %v903, %v905
      %v907 = vadd.f32 %v903, %v906
      %vm908 = vweird.f32 %v563
      %vm909 = vweird.f32 %v903
      %vm910 = vmor %vm908, %vm909
      %v911 = vsel %vm910, %v903, %v907
      %v912 = vand.u32 2147483647, %v563
      %vm913 = vcmp.eq.f32.partialorder %v912, 8.507059e+37
      %v914 = vand.u32 %v563, 2147483648
      %v915 = vor.u32 1.1754944e-38, %v914
      %v916 = vsel %vm913, %v915, %v911
      %v917 = vrcp.pop %v566
      %v918 = vmul.f32 %v566, %v917
      %v919 = vsub.f32 1.0, %v918
      %v920 = vmul.f32 %v917, %v919
      %v921 = vadd.f32 %v917, %v920
      %vm922 = vweird.f32 %v566
      %vm923 = vweird.f32 %v917
      %vm924 = vmor %vm922, %vm923
      %v925 = vsel %vm924, %v917, %v921
      %v926 = vand.u32 2147483647, %v566
      %vm927 = vcmp.eq.f32.partialorder %v926, 8.507059e+37
      %v928 = vand.u32 %v566, 2147483648
      %v929 = vor.u32 1.1754944e-38, %v928
      %v930 = vsel %vm927, %v929, %v925
      %vm931 = vcmp.eq.f32.partialorder %v305, %v334
      %vm932 = vcmp.eq.f32.partialorder %v306, %v337
      %vm933 = vcmp.eq.f32.partialorder %v307, %v340
      %vm934 = vcmp.eq.f32.partialorder %v308, %v343
      %vm935 = vcmp.eq.f32.partialorder %v309, %v346
      %vm936 = vcmp.eq.f32.partialorder %v310, %v349
      %vm937 = vcmp.eq.f32.partialorder %v311, %v352
      %vm938 = vcmp.eq.f32.partialorder %v312, %v355
      %vm939 = vcmp.eq.f32.partialorder %v313, %v358
      %vm940 = vcmp.eq.f32.partialorder %v314, %v361
      %vm941 = vcmp.eq.f32.partialorder %v315, %v364
      %vm942 = vcmp.eq.f32.partialorder %v316, %v367
      %vm943 = vcmp.eq.f32.partialorder %v317, %v371
      %vm944 = vcmp.eq.f32.partialorder %v318, %v374
      %vm945 = vcmp.eq.f32.partialorder %v319, %v377
      %vm946 = vcmp.eq.f32.partialorder %v320, %v380
      %vm947 = vcmp.eq.f32.partialorder %v321, %v383
      %vm948 = vcmp.eq.f32.partialorder %v322, %v386
      %vm949 = vcmp.eq.f32.partialorder %v323, %v389
      %vm950 = vcmp.eq.f32.partialorder %v324, %v392
      %vm951 = vcmp.eq.f32.partialorder %v325, %v395
      %vm952 = vcmp.eq.f32.partialorder %v326, %v398
      %vm953 = vcmp.eq.f32.partialorder %v327, %v401
      %vm954 = vcmp.eq.f32.partialorder %v328, %v404
      %vm955 = vcmp.eq.f32.partialorder %v329, %v407
      %vm956 = vcmp.eq.f32.partialorder %v330, %v410
      %v957 = vcvt.s32.f32 %v302
      %v958 = vsel %vm931, %v957, 32.0
      %v959 = vsel %vm932, %v957, 32.0
      %v960 = vsel %vm933, %v957, 32.0
      %v961 = vsel %vm934, %v957, 32.0
      %v962 = vsel %vm935, %v957, 32.0
      %v963 = vsel %vm936, %v957, 32.0
      %v964 = vsel %vm937, %v957, 32.0
      %v965 = vsel %vm938, %v957, 32.0
      %v966 = vsel %vm939, %v957, 32.0
      %v967 = vsel %vm940, %v957, 32.0
      %v968 = vsel %vm941, %v957, 32.0
      %v969 = vsel %vm942, %v957, 32.0
      %v970 = vsel %vm943, %v957, 32.0
      %v971 = vsel %vm944, %v957, 32.0
      %v972 = vsel %vm945, %v957, 32.0
      %v973 = vsel %vm946, %v957, 32.0
      %v974 = vsel %vm947, %v957, 32.0
      %v975 = vsel %vm948, %v957, 32.0
      %v976 = vsel %vm949, %v957, 32.0
      %v977 = vsel %vm950, %v957, 32.0
      %v978 = vsel %vm951, %v957, 32.0
      %v979 = vsel %vm952, %v957, 32.0
      %v980 = vsel %vm953, %v957, 32.0
      %v981 = vsel %vm954, %v957, 32.0
      %v982 = vsel %vm955, %v957, 32.0
      %v983 = vsel %vm956, %v957, 32.0
      %v984 = vsel %vm331, %v958, inf
      %985 = vmin.xlane.f32.xlu0 %v984
      %v986 = vpop.xlane.xlu0 %985
      %v987 = vsel %vm331, %v959, inf
      %988 = vmin.xlane.f32.xlu0 %v987
      %v989 = vpop.xlane.xlu0 %988
      %v990 = vsel %vm331, %v960, inf
      %991 = vmin.xlane.f32.xlu0 %v990
      %v992 = vpop.xlane.xlu0 %991
      %v993 = vsel %vm331, %v961, inf
      %994 = vmin.xlane.f32.xlu0 %v993
      %v995 = vpop.xlane.xlu0 %994
      %v996 = vsel %vm331, %v962, inf
      %997 = vmin.xlane.f32.xlu0 %v996
      %v998 = vpop.xlane.xlu0 %997
      %v999 = vsel %vm331, %v963, inf
      %1000 = vmin.xlane.f32.xlu0 %v999
      %v1001 = vpop.xlane.xlu0 %1000
      %v1002 = vsel %vm331, %v964, inf
      %1003 = vmin.xlane.f32.xlu0 %v1002
      %v1004 = vpop.xlane.xlu0 %1003
      %v1005 = vsel %vm331, %v965, inf
      %1006 = vmin.xlane.f32.xlu0 %v1005
      %v1007 = vpop.xlane.xlu0 %1006
      %v1008 = vsel %vm331, %v966, inf
      %1009 = vmin.xlane.f32.xlu0 %v1008
      %v1010 = vpop.xlane.xlu0 %1009
      %v1011 = vsel %vm331, %v967, inf
      %1012 = vmin.xlane.f32.xlu0 %v1011
      %v1013 = vpop.xlane.xlu0 %1012
      %v1014 = vsel %vm331, %v968, inf
      %1015 = vmin.xlane.f32.xlu0 %v1014
      %v1016 = vpop.xlane.xlu0 %1015
      %v1017 = vsel %vm331, %v969, inf
      %1018 = vmin.xlane.f32.xlu0 %v1017
      %v1019 = vpop.xlane.xlu0 %1018
      %v1020 = vsel %vm368, %v970, inf
      %1021 = vmin.xlane.f32.xlu0 %v1020
      %v1022 = vpop.xlane.xlu0 %1021
      %v1023 = vsel %vm331, %v971, inf
      %1024 = vmin.xlane.f32.xlu0 %v1023
      %v1025 = vpop.xlane.xlu0 %1024
      %v1026 = vsel %vm331, %v972, inf
      %1027 = vmin.xlane.f32.xlu0 %v1026
      %v1028 = vpop.xlane.xlu0 %1027
      %v1029 = vsel %vm331, %v973, inf
      %1030 = vmin.xlane.f32.xlu0 %v1029
      %v1031 = vpop.xlane.xlu0 %1030
      %v1032 = vsel %vm331, %v974, inf
      %1033 = vmin.xlane.f32.xlu0 %v1032
      %v1034 = vpop.xlane.xlu0 %1033
      %v1035 = vsel %vm331, %v975, inf
      %1036 = vmin.xlane.f32.xlu0 %v1035
      %v1037 = vpop.xlane.xlu0 %1036
      %v1038 = vsel %vm331, %v976, inf
      %1039 = vmin.xlane.f32.xlu0 %v1038
      %v1040 = vpop.xlane.xlu0 %1039
      %v1041 = vsel %vm331, %v977, inf
      %1042 = vmin.xlane.f32.xlu0 %v1041
      %v1043 = vpop.xlane.xlu0 %1042
      %v1044 = vsel %vm331, %v978, inf
      %1045 = vmin.xlane.f32.xlu0 %v1044
      %v1046 = vpop.xlane.xlu0 %1045
      %v1047 = vsel %vm331, %v979, inf
      %1048 = vmin.xlane.f32.xlu0 %v1047
      %v1049 = vpop.xlane.xlu0 %1048
      %v1050 = vsel %vm331, %v980, inf
      %1051 = vmin.xlane.f32.xlu0 %v1050
      %v1052 = vpop.xlane.xlu0 %1051
      %v1053 = vsel %vm331, %v981, inf
      %1054 = vmin.xlane.f32.xlu0 %v1053
      %v1055 = vpop.xlane.xlu0 %1054
      %v1056 = vsel %vm331, %v982, inf
      %1057 = vmin.xlane.f32.xlu0 %v1056
      %v1058 = vpop.xlane.xlu0 %1057
      %v1059 = vsel %vm368, %v983, inf
      %1060 = vmin.xlane.f32.xlu0 %v1059
      %v1061 = vpop.xlane.xlu0 %1060
      %v1062 = vld [vmem:[%s261] sm:$0xff]
      %v1063 = vld [vmem:[%s261 + $0x8] sm:$0xff]
      %v1064 = vld [vmem:[%s261 + $0x10] sm:$0xff]
      %v1065 = vld [vmem:[%s261 + $0x18] sm:$0xff]
      %v1066 = vld [vmem:[%s261 + $0x20] sm:$0xff]
      %v1067 = vld [vmem:[%s261 + $0x28] sm:$0xff]
      %v1068 = vld [vmem:[%s261 + $0x30] sm:$0xff]
      %v1069 = vld [vmem:[%s261 + $0x38] sm:$0xff]
      %v1070 = vld [vmem:[%s261 + $0x40] sm:$0xff]
      %v1071 = vld [vmem:[%s261 + $0x48] sm:$0xff]
      %v1072 = vld [vmem:[%s261 + $0x50] sm:$0xff]
      %v1073 = vld [vmem:[%s261 + $0x58] sm:$0xff]
      %v1074 = vld [vmem:[%s261 + $0x60] sm:$0xf]
      %v1075 = vld [vmem:[%s261 + $0x68] sm:$0xff]
      %v1076 = vld [vmem:[%s261 + $0x70] sm:$0xff]
      %v1077 = vld [vmem:[%s261 + $0x78] sm:$0xff]
      %v1078 = vld [vmem:[%s261 + $0x80] sm:$0xff]
      %v1079 = vld [vmem:[%s261 + $0x88] sm:$0xff]
      %v1080 = vld [vmem:[%s261 + $0x90] sm:$0xff]
      %v1081 = vld [vmem:[%s261 + $0x98] sm:$0xff]
      %v1082 = vld [vmem:[%s261 + $0xa0] sm:$0xff]
      %v1083 = vld [vmem:[%s261 + $0xa8] sm:$0xff]
      %v1084 = vld [vmem:[%s261 + $0xb0] sm:$0xff]
      %v1085 = vld [vmem:[%s261 + $0xb8] sm:$0xff]
      %v1086 = vld [vmem:[%s261 + $0xc0] sm:$0xff]
      %v1087 = vld [vmem:[%s261 + $0xc8] sm:$0xf]
      %vm1088 = vcmp.eq.s32.totalorder %v1062, 0
      %vm1089 = vcmp.eq.s32.totalorder %v1063, 0
      %vm1090 = vcmp.eq.s32.totalorder %v1064, 0
      %vm1091 = vcmp.eq.s32.totalorder %v1065, 0
      %vm1092 = vcmp.eq.s32.totalorder %v1066, 0
      %vm1093 = vcmp.eq.s32.totalorder %v1067, 0
      %vm1094 = vcmp.eq.s32.totalorder %v1068, 0
      %vm1095 = vcmp.eq.s32.totalorder %v1069, 0
      %vm1096 = vcmp.eq.s32.totalorder %v1070, 0
      %vm1097 = vcmp.eq.s32.totalorder %v1071, 0
      %vm1098 = vcmp.eq.s32.totalorder %v1072, 0
      %vm1099 = vcmp.eq.s32.totalorder %v1073, 0
      %vm1100 = vcmp.eq.s32.totalorder %v1074, 0
      %vm1101 = vcmp.eq.s32.totalorder %v1075, 0
      %vm1102 = vcmp.eq.s32.totalorder %v1076, 0
      %vm1103 = vcmp.eq.s32.totalorder %v1077, 0
      %vm1104 = vcmp.eq.s32.totalorder %v1078, 0
      %vm1105 = vcmp.eq.s32.totalorder %v1079, 0
      %vm1106 = vcmp.eq.s32.totalorder %v1080, 0
      %vm1107 = vcmp.eq.s32.totalorder %v1081, 0
      %vm1108 = vcmp.eq.s32.totalorder %v1082, 0
      %vm1109 = vcmp.eq.s32.totalorder %v1083, 0
      %vm1110 = vcmp.eq.s32.totalorder %v1084, 0
      %vm1111 = vcmp.eq.s32.totalorder %v1085, 0
      %vm1112 = vcmp.eq.s32.totalorder %v1086, 0
      %vm1113 = vcmp.eq.s32.totalorder %v1087, 0
      %vm1114 = vcmp.ne.f32.partialorder %v986, 31.0
      %vm1115 = vcmp.ne.f32.partialorder %v989, 31.0
      %vm1116 = vcmp.ne.f32.partialorder %v992, 31.0
      %vm1117 = vcmp.ne.f32.partialorder %v995, 31.0
      %vm1118 = vcmp.ne.f32.partialorder %v998, 31.0
      %vm1119 = vcmp.ne.f32.partialorder %v1001, 31.0
      %vm1120 = vcmp.ne.f32.partialorder %v1004, 31.0
      %vm1121 = vcmp.ne.f32.partialorder %v1007, 31.0
      %vm1122 = vcmp.ne.f32.partialorder %v1010, 31.0
      %vm1123 = vcmp.ne.f32.partialorder %v1013, 31.0
      %vm1124 = vcmp.ne.f32.partialorder %v1016, 31.0
      %vm1125 = vcmp.ne.f32.partialorder %v1019, 31.0
      %vm1126 = vcmp.ne.f32.partialorder %v1022, 31.0
      %vm1127 = vcmp.ne.f32.partialorder %v1025, 31.0
      %vm1128 = vcmp.ne.f32.partialorder %v1028, 31.0
      %vm1129 = vcmp.ne.f32.partialorder %v1031, 31.0
      %vm1130 = vcmp.ne.f32.partialorder %v1034, 31.0
      %vm1131 = vcmp.ne.f32.partialorder %v1037, 31.0
      %vm1132 = vcmp.ne.f32.partialorder %v1040, 31.0
      %vm1133 = vcmp.ne.f32.partialorder %v1043, 31.0
      %vm1134 = vcmp.ne.f32.partialorder %v1046, 31.0
      %vm1135 = vcmp.ne.f32.partialorder %v1049, 31.0
      %vm1136 = vcmp.ne.f32.partialorder %v1052, 31.0
      %vm1137 = vcmp.ne.f32.partialorder %v1055, 31.0
      %vm1138 = vcmp.ne.f32.partialorder %v1058, 31.0
      %vm1139 = vcmp.ne.f32.partialorder %v1061, 31.0
      %vm1140 = vmand %vm1088, %vm1114
      %vm1141 = vmand %vm1089, %vm1115
      %vm1142 = vmand %vm1090, %vm1116
      %vm1143 = vmand %vm1091, %vm1117
      %vm1144 = vmand %vm1092, %vm1118
      %vm1145 = vmand %vm1093, %vm1119
      %vm1146 = vmand %vm1094, %vm1120
      %vm1147 = vmand %vm1095, %vm1121
      %vm1148 = vmand %vm1096, %vm1122
      %vm1149 = vmand %vm1097, %vm1123
      %vm1150 = vmand %vm1098, %vm1124
      %vm1151 = vmand %vm1099, %vm1125
      %vm1152 = vmand %vm1100, %vm1126
      %vm1153 = vmand %vm1101, %vm1127
      %vm1154 = vmand %vm1102, %vm1128
      %vm1155 = vmand %vm1103, %vm1129
      %vm1156 = vmand %vm1104, %vm1130
      %vm1157 = vmand %vm1105, %vm1131
      %vm1158 = vmand %vm1106, %vm1132
      %vm1159 = vmand %vm1107, %vm1133
      %vm1160 = vmand %vm1108, %vm1134
      %vm1161 = vmand %vm1109, %vm1135
      %vm1162 = vmand %vm1110, %vm1136
      %vm1163 = vmand %vm1111, %vm1137
      %vm1164 = vmand %vm1112, %vm1138
      %vm1165 = vmand %vm1113, %vm1139
      %v1166 = vld [vmem:[%s254] sm:$0xff]
      %v1167 = vld [vmem:[%s254 + $0x8] sm:$0xff]
      %v1168 = vld [vmem:[%s254 + $0x10] sm:$0xff]
      %v1169 = vld [vmem:[%s254 + $0x18] sm:$0xff]
      %v1170 = vld [vmem:[%s254 + $0x20] sm:$0xff]
      %v1171 = vld [vmem:[%s254 + $0x28] sm:$0xff]
      %v1172 = vld [vmem:[%s254 + $0x30] sm:$0xff]
      %v1173 = vld [vmem:[%s254 + $0x38] sm:$0xff]
      %v1174 = vld [vmem:[%s254 + $0x40] sm:$0xff]
      %v1175 = vld [vmem:[%s254 + $0x48] sm:$0xff]
      %v1176 = vld [vmem:[%s254 + $0x50] sm:$0xff]
      %v1177 = vld [vmem:[%s254 + $0x58] sm:$0xff]
      %v1178 = vld [vmem:[%s254 + $0x60] sm:$0xf]
      %v1179 = vld [vmem:[%s254 + $0x68] sm:$0xff]
      %v1180 = vld [vmem:[%s254 + $0x70] sm:$0xff]
      %v1181 = vld [vmem:[%s254 + $0x78] sm:$0xff]
      %v1182 = vld [vmem:[%s254 + $0x80] sm:$0xff]
      %v1183 = vld [vmem:[%s254 + $0x88] sm:$0xff]
      %v1184 = vld [vmem:[%s254 + $0x90] sm:$0xff]
      %v1185 = vld [vmem:[%s254 + $0x98] sm:$0xff]
      %v1186 = vld [vmem:[%s254 + $0xa0] sm:$0xff]
      %v1187 = vld [vmem:[%s254 + $0xa8] sm:$0xff]
      %v1188 = vld [vmem:[%s254 + $0xb0] sm:$0xff]
      %v1189 = vld [vmem:[%s254 + $0xb8] sm:$0xff]
      %v1190 = vld [vmem:[%s254 + $0xc0] sm:$0xff]
      %v1191 = vld [vmem:[%s254 + $0xc8] sm:$0xf]
      %1218 = vrot.lane.b32.xlu0 %v1166, 126
      %v1219 = vpop.permute.xlu0 %1218
      %1220 = vrot.lane.b32.xlu0 %v1167, 126
      %v1221 = vpop.permute.xlu0 %1220
      %1222 = vrot.lane.b32.xlu0 %v1168, 126
      %v1223 = vpop.permute.xlu0 %1222
      %1224 = vrot.lane.b32.xlu0 %v1169, 126
      %v1225 = vpop.permute.xlu0 %1224
      %1226 = vrot.lane.b32.xlu0 %v1170, 126
      %v1227 = vpop.permute.xlu0 %1226
      %1228 = vrot.lane.b32.xlu0 %v1171, 126
      %v1229 = vpop.permute.xlu0 %1228
      %1230 = vrot.lane.b32.xlu0 %v1172, 126
      %v1231 = vpop.permute.xlu0 %1230
      %1232 = vrot.lane.b32.xlu0 %v1173, 126
      %v1233 = vpop.permute.xlu0 %1232
      %1234 = vrot.lane.b32.xlu0 %v1174, 126
      %v1235 = vpop.permute.xlu0 %1234
      %1236 = vrot.lane.b32.xlu0 %v1175, 126
      %v1237 = vpop.permute.xlu0 %1236
      %1238 = vrot.lane.b32.xlu0 %v1176, 126
      %v1239 = vpop.permute.xlu0 %1238
      %1240 = vrot.lane.b32.xlu0 %v1177, 126
      %v1241 = vpop.permute.xlu0 %1240
      %1242 = vrot.lane.b32.xlu0 %v1178, 126
      %v1243 = vpop.permute.xlu0 %1242
      %1244 = vrot.lane.b32.xlu0 %v1179, 126
      %v1245 = vpop.permute.xlu0 %1244
      %1246 = vrot.lane.b32.xlu0 %v1180, 126
      %v1247 = vpop.permute.xlu0 %1246
      %1248 = vrot.lane.b32.xlu0 %v1181, 126
      %v1249 = vpop.permute.xlu0 %1248
      %1250 = vrot.lane.b32.xlu0 %v1182, 126
      %v1251 = vpop.permute.xlu0 %1250
      %1252 = vrot.lane.b32.xlu0 %v1183, 126
      %v1253 = vpop.permute.xlu0 %1252
      %1254 = vrot.lane.b32.xlu0 %v1184, 126
      %v1255 = vpop.permute.xlu0 %1254
      %1256 = vrot.lane.b32.xlu0 %v1185, 126
      %v1257 = vpop.permute.xlu0 %1256
      %1258 = vrot.lane.b32.xlu0 %v1186, 126
      %v1259 = vpop.permute.xlu0 %1258
      %1260 = vrot.lane.b32.xlu0 %v1187, 126
      %v1261 = vpop.permute.xlu0 %1260
      %1262 = vrot.lane.b32.xlu0 %v1188, 126
      %v1263 = vpop.permute.xlu0 %1262
      %1264 = vrot.lane.b32.xlu0 %v1189, 126
      %v1265 = vpop.permute.xlu0 %1264
      %1266 = vrot.lane.b32.xlu0 %v1190, 126
      %v1267 = vpop.permute.xlu0 %1266
      %1268 = vrot.lane.b32.xlu0 %v1191, 126
      %v1269 = vpop.permute.xlu0 %1268
      %1296 = vrot.lane.b32.xlu0 %v1166, 2
      %v1297 = vpop.permute.xlu0 %1296
      %1298 = vrot.lane.b32.xlu0 %v1167, 2
      %v1299 = vpop.permute.xlu0 %1298
      %1300 = vrot.lane.b32.xlu0 %v1168, 2
      %v1301 = vpop.permute.xlu0 %1300
      %1302 = vrot.lane.b32.xlu0 %v1169, 2
      %v1303 = vpop.permute.xlu0 %1302
      %1304 = vrot.lane.b32.xlu0 %v1170, 2
      %v1305 = vpop.permute.xlu0 %1304
      %1306 = vrot.lane.b32.xlu0 %v1171, 2
      %v1307 = vpop.permute.xlu0 %1306
      %1308 = vrot.lane.b32.xlu0 %v1172, 2
      %v1309 = vpop.permute.xlu0 %1308
      %1310 = vrot.lane.b32.xlu0 %v1173, 2
      %v1311 = vpop.permute.xlu0 %1310
      %1312 = vrot.lane.b32.xlu0 %v1174, 2
      %v1313 = vpop.permute.xlu0 %1312
      %1314 = vrot.lane.b32.xlu0 %v1175, 2
      %v1315 = vpop.permute.xlu0 %1314
      %1316 = vrot.lane.b32.xlu0 %v1176, 2
      %v1317 = vpop.permute.xlu0 %1316
      %1318 = vrot.lane.b32.xlu0 %v1177, 2
      %v1319 = vpop.permute.xlu0 %1318
      %1320 = vrot.lane.b32.xlu0 %v1178, 2
      %v1321 = vpop.permute.xlu0 %1320
      %1322 = vrot.lane.b32.xlu0 %v1179, 2
      %v1323 = vpop.permute.xlu0 %1322
      %1324 = vrot.lane.b32.xlu0 %v1180, 2
      %v1325 = vpop.permute.xlu0 %1324
      %1326 = vrot.lane.b32.xlu0 %v1181, 2
      %v1327 = vpop.permute.xlu0 %1326
      %1328 = vrot.lane.b32.xlu0 %v1182, 2
      %v1329 = vpop.permute.xlu0 %1328
      %1330 = vrot.lane.b32.xlu0 %v1183, 2
      %v1331 = vpop.permute.xlu0 %1330
      %1332 = vrot.lane.b32.xlu0 %v1184, 2
      %v1333 = vpop.permute.xlu0 %1332
      %1334 = vrot.lane.b32.xlu0 %v1185, 2
      %v1335 = vpop.permute.xlu0 %1334
      %1336 = vrot.lane.b32.xlu0 %v1186, 2
      %v1337 = vpop.permute.xlu0 %1336
      %1338 = vrot.lane.b32.xlu0 %v1187, 2
      %v1339 = vpop.permute.xlu0 %1338
      %1340 = vrot.lane.b32.xlu0 %v1188, 2
      %v1341 = vpop.permute.xlu0 %1340
      %1342 = vrot.lane.b32.xlu0 %v1189, 2
      %v1343 = vpop.permute.xlu0 %1342
      %1344 = vrot.lane.b32.xlu0 %v1190, 2
      %v1345 = vpop.permute.xlu0 %1344
      %1346 = vrot.lane.b32.xlu0 %v1191, 2
      %v1347 = vpop.permute.xlu0 %1346
      %vm1374 = vcmask 15360
      %v1375 = vsel %vm1374, %v1219, %v1297
      %v1376 = vsel %vm1374, %v1221, %v1299
      %v1377 = vsel %vm1374, %v1223, %v1301
      %v1378 = vsel %vm1374, %v1225, %v1303
      %v1379 = vsel %vm1374, %v1227, %v1305
      %v1380 = vsel %vm1374, %v1229, %v1307
      %v1381 = vsel %vm1374, %v1231, %v1309
      %v1382 = vsel %vm1374, %v1233, %v1311
      %v1383 = vsel %vm1374, %v1235, %v1313
      %v1384 = vsel %vm1374, %v1237, %v1315
      %v1385 = vsel %vm1374, %v1239, %v1317
      %v1386 = vsel %vm1374, %v1241, %v1319
      %v1387 = vsel %vm1374, %v1243, %v1321
      %v1388 = vsel %vm1374, %v1245, %v1323
      %v1389 = vsel %vm1374, %v1247, %v1325
      %v1390 = vsel %vm1374, %v1249, %v1327
      %v1391 = vsel %vm1374, %v1251, %v1329
      %v1392 = vsel %vm1374, %v1253, %v1331
      %v1393 = vsel %vm1374, %v1255, %v1333
      %v1394 = vsel %vm1374, %v1257, %v1335
      %v1395 = vsel %vm1374, %v1259, %v1337
      %v1396 = vsel %vm1374, %v1261, %v1339
      %v1397 = vsel %vm1374, %v1263, %v1341
      %v1398 = vsel %vm1374, %v1265, %v1343
      %v1399 = vsel %vm1374, %v1267, %v1345
      %v1400 = vsel %vm1374, %v1269, %v1347
      %vm1401 = vcmp.lt.s32.totalorder %v302, 2
      %v1402 = vsel %vm1401, -0.5, 0.0
      %vm1403 = vcmp.eq.s32.totalorder %v302, 0
      %v1404 = vsel %vm1403, -1.0, 1.0
      %v1405 = vsel %vm1403, 1.0, 0.0
      %v1406 = vld [vmem:[%s266] sm:$0x1]
      %v1407 = vld [vmem:[%s266 + $0x1] sm:$0x1]
      %v1408 = vmul.f32 %v1402, %v1375
      %v1409 = vmul.f32 %v1402, %v1376
      %v1410 = vmul.f32 %v1402, %v1377
      %v1411 = vmul.f32 %v1402, %v1378
      %v1412 = vmul.f32 %v1402, %v1379
      %v1413 = vmul.f32 %v1402, %v1380
      %v1414 = vmul.f32 %v1402, %v1381
      %v1415 = vmul.f32 %v1402, %v1382
      %v1416 = vmul.f32 %v1402, %v1383
      %v1417 = vmul.f32 %v1402, %v1384
      %v1418 = vmul.f32 %v1402, %v1385
      %v1419 = vmul.f32 %v1402, %v1386
      %v1420 = vmul.f32 %v1402, %v1387
      %v1421 = vmul.f32 %v1402, %v1388
      %v1422 = vmul.f32 %v1402, %v1389
      %v1423 = vmul.f32 %v1402, %v1390
      %v1424 = vmul.f32 %v1402, %v1391
      %v1425 = vmul.f32 %v1402, %v1392
      %v1426 = vmul.f32 %v1402, %v1393
      %v1427 = vmul.f32 %v1402, %v1394
      %v1428 = vmul.f32 %v1402, %v1395
      %v1429 = vmul.f32 %v1402, %v1396
      %v1430 = vmul.f32 %v1402, %v1397
      %v1431 = vmul.f32 %v1402, %v1398
      %v1432 = vmul.f32 %v1402, %v1399
      %v1433 = vmul.f32 %v1402, %v1400
      %v1434 = vadd.f32 %v1166, %v1408
      %v1435 = vadd.f32 %v1167, %v1409
      %v1436 = vadd.f32 %v1168, %v1410
      %v1437 = vadd.f32 %v1169, %v1411
      %v1438 = vadd.f32 %v1170, %v1412
      %v1439 = vadd.f32 %v1171, %v1413
      %v1440 = vadd.f32 %v1172, %v1414
      %v1441 = vadd.f32 %v1173, %v1415
      %v1442 = vadd.f32 %v1174, %v1416
      %v1443 = vadd.f32 %v1175, %v1417
      %v1444 = vadd.f32 %v1176, %v1418
      %v1445 = vadd.f32 %v1177, %v1419
      %v1446 = vadd.f32 %v1178, %v1420
      %v1447 = vadd.f32 %v1179, %v1421
      %v1448 = vadd.f32 %v1180, %v1422
      %v1449 = vadd.f32 %v1181, %v1423
      %v1450 = vadd.f32 %v1182, %v1424
      %v1451 = vadd.f32 %v1183, %v1425
      %v1452 = vadd.f32 %v1184, %v1426
      %v1453 = vadd.f32 %v1185, %v1427
      %v1454 = vadd.f32 %v1186, %v1428
      %v1455 = vadd.f32 %v1187, %v1429
      %v1456 = vadd.f32 %v1188, %v1430
      %v1457 = vadd.f32 %v1189, %v1431
      %v1458 = vadd.f32 %v1190, %v1432
      %v1459 = vadd.f32 %v1191, %v1433
      %v1460 = vmul.f32 %v1166, %v1404
      %v1461 = vmul.f32 %v1167, %v1404
      %v1462 = vmul.f32 %v1168, %v1404
      %v1463 = vmul.f32 %v1169, %v1404
      %v1464 = vmul.f32 %v1170, %v1404
      %v1465 = vmul.f32 %v1171, %v1404
      %v1466 = vmul.f32 %v1172, %v1404
      %v1467 = vmul.f32 %v1173, %v1404
      %v1468 = vmul.f32 %v1174, %v1404
      %v1469 = vmul.f32 %v1175, %v1404
      %v1470 = vmul.f32 %v1176, %v1404
      %v1471 = vmul.f32 %v1177, %v1404
      %v1472 = vmul.f32 %v1178, %v1404
      %v1473 = vmul.f32 %v1179, %v1404
      %v1474 = vmul.f32 %v1180, %v1404
      %v1475 = vmul.f32 %v1181, %v1404
      %v1476 = vmul.f32 %v1182, %v1404
      %v1477 = vmul.f32 %v1183, %v1404
      %v1478 = vmul.f32 %v1184, %v1404
      %v1479 = vmul.f32 %v1185, %v1404
      %v1480 = vmul.f32 %v1186, %v1404
      %v1481 = vmul.f32 %v1187, %v1404
      %v1482 = vmul.f32 %v1188, %v1404
      %v1483 = vmul.f32 %v1189, %v1404
      %v1484 = vmul.f32 %v1190, %v1404
      %v1485 = vmul.f32 %v1191, %v1404
      %v1486 = vadd.f32 %v1460, %v1405
      %v1487 = vadd.f32 %v1461, %v1405
      %v1488 = vadd.f32 %v1462, %v1405
      %v1489 = vadd.f32 %v1463, %v1405
      %v1490 = vadd.f32 %v1464, %v1405
      %v1491 = vadd.f32 %v1465, %v1405
      %v1492 = vadd.f32 %v1466, %v1405
      %v1493 = vadd.f32 %v1467, %v1405
      %v1494 = vadd.f32 %v1468, %v1405
      %v1495 = vadd.f32 %v1469, %v1405
      %v1496 = vadd.f32 %v1470, %v1405
      %v1497 = vadd.f32 %v1471, %v1405
      %v1498 = vadd.f32 %v1472, %v1405
      %v1499 = vadd.f32 %v1473, %v1405
      %v1500 = vadd.f32 %v1474, %v1405
      %v1501 = vadd.f32 %v1475, %v1405
      %v1502 = vadd.f32 %v1476, %v1405
      %v1503 = vadd.f32 %v1477, %v1405
      %v1504 = vadd.f32 %v1478, %v1405
      %v1505 = vadd.f32 %v1479, %v1405
      %v1506 = vadd.f32 %v1480, %v1405
      %v1507 = vadd.f32 %v1481, %v1405
      %v1508 = vadd.f32 %v1482, %v1405
      %v1509 = vadd.f32 %v1483, %v1405
      %v1510 = vadd.f32 %v1484, %v1405
      %v1511 = vadd.f32 %v1485, %v1405
      %v1512 = vadd.f32 %v1486, %v1408
      %v1513 = vadd.f32 %v1487, %v1409
      %v1514 = vadd.f32 %v1488, %v1410
      %v1515 = vadd.f32 %v1489, %v1411
      %v1516 = vadd.f32 %v1490, %v1412
      %v1517 = vadd.f32 %v1491, %v1413
      %v1518 = vadd.f32 %v1492, %v1414
      %v1519 = vadd.f32 %v1493, %v1415
      %v1520 = vadd.f32 %v1494, %v1416
      %v1521 = vadd.f32 %v1495, %v1417
      %v1522 = vadd.f32 %v1496, %v1418
      %v1523 = vadd.f32 %v1497, %v1419
      %v1524 = vadd.f32 %v1498, %v1420
      %v1525 = vadd.f32 %v1499, %v1421
      %v1526 = vadd.f32 %v1500, %v1422
      %v1527 = vadd.f32 %v1501, %v1423
      %v1528 = vadd.f32 %v1502, %v1424
      %v1529 = vadd.f32 %v1503, %v1425
      %v1530 = vadd.f32 %v1504, %v1426
      %v1531 = vadd.f32 %v1505, %v1427
      %v1532 = vadd.f32 %v1506, %v1428
      %v1533 = vadd.f32 %v1507, %v1429
      %v1534 = vadd.f32 %v1508, %v1430
      %v1535 = vadd.f32 %v1509, %v1431
      %v1536 = vadd.f32 %v1510, %v1432
      %v1537 = vadd.f32 %v1511, %v1433
      %v1540 = vperm.slane %v1406, 0
      %v1541 = vperm.slane %v1407, 0
      %v1544 = vmul.f32 %v1434, %v1540
      %v1545 = vmul.f32 %v1435, %v1540
      %v1546 = vmul.f32 %v1436, %v1540
      %v1547 = vmul.f32 %v1437, %v1540
      %v1548 = vmul.f32 %v1438, %v1540
      %v1549 = vmul.f32 %v1439, %v1540
      %v1550 = vmul.f32 %v1440, %v1540
      %v1551 = vmul.f32 %v1441, %v1540
      %v1552 = vmul.f32 %v1442, %v1540
      %v1553 = vmul.f32 %v1443, %v1540
      %v1554 = vmul.f32 %v1444, %v1540
      %v1555 = vmul.f32 %v1445, %v1540
      %v1556 = vmul.f32 %v1446, %v1540
      %v1557 = vmul.f32 %v1447, %v1541
      %v1558 = vmul.f32 %v1448, %v1541
      %v1559 = vmul.f32 %v1449, %v1541
      %v1560 = vmul.f32 %v1450, %v1541
      %v1561 = vmul.f32 %v1451, %v1541
      %v1562 = vmul.f32 %v1452, %v1541
      %v1563 = vmul.f32 %v1453, %v1541
      %v1564 = vmul.f32 %v1454, %v1541
      %v1565 = vmul.f32 %v1455, %v1541
      %v1566 = vmul.f32 %v1456, %v1541
      %v1567 = vmul.f32 %v1457, %v1541
      %v1568 = vmul.f32 %v1458, %v1541
      %v1569 = vmul.f32 %v1459, %v1541
      %v1570 = vmul.f32 %v1512, %v1540
      %v1571 = vmul.f32 %v1513, %v1540
      %v1572 = vmul.f32 %v1514, %v1540
      %v1573 = vmul.f32 %v1515, %v1540
      %v1574 = vmul.f32 %v1516, %v1540
      %v1575 = vmul.f32 %v1517, %v1540
      %v1576 = vmul.f32 %v1518, %v1540
      %v1577 = vmul.f32 %v1519, %v1540
      %v1578 = vmul.f32 %v1520, %v1540
      %v1579 = vmul.f32 %v1521, %v1540
      %v1580 = vmul.f32 %v1522, %v1540
      %v1581 = vmul.f32 %v1523, %v1540
      %v1582 = vmul.f32 %v1524, %v1540
      %v1583 = vmul.f32 %v1525, %v1541
      %v1584 = vmul.f32 %v1526, %v1541
      %v1585 = vmul.f32 %v1527, %v1541
      %v1586 = vmul.f32 %v1528, %v1541
      %v1587 = vmul.f32 %v1529, %v1541
      %v1588 = vmul.f32 %v1530, %v1541
      %v1589 = vmul.f32 %v1531, %v1541
      %v1590 = vmul.f32 %v1532, %v1541
      %v1591 = vmul.f32 %v1533, %v1541
      %v1592 = vmul.f32 %v1534, %v1541
      %v1593 = vmul.f32 %v1535, %v1541
      %v1594 = vmul.f32 %v1536, %v1541
      %v1595 = vmul.f32 %v1537, %v1541
      %vm1596 = vcmp.eq.s32.totalorder %v302, 1
      %vm1597 = vcmp.eq.s32.totalorder %v302, 2
      %v1598 = vsel %vm1140, 1, 0
      %v1599 = vsel %vm1141, 1, 0
      %v1600 = vsel %vm1142, 1, 0
      %v1601 = vsel %vm1143, 1, 0
      %v1602 = vsel %vm1144, 1, 0
      %v1603 = vsel %vm1145, 1, 0
      %v1604 = vsel %vm1146, 1, 0
      %v1605 = vsel %vm1147, 1, 0
      %v1606 = vsel %vm1148, 1, 0
      %v1607 = vsel %vm1149, 1, 0
      %v1608 = vsel %vm1150, 1, 0
      %v1609 = vsel %vm1151, 1, 0
      %v1610 = vsel %vm1152, 1, 0
      %v1611 = vsel %vm1153, 1, 0
      %v1612 = vsel %vm1154, 1, 0
      %v1613 = vsel %vm1155, 1, 0
      %v1614 = vsel %vm1156, 1, 0
      %v1615 = vsel %vm1157, 1, 0
      %v1616 = vsel %vm1158, 1, 0
      %v1617 = vsel %vm1159, 1, 0
      %v1618 = vsel %vm1160, 1, 0
      %v1619 = vsel %vm1161, 1, 0
      %v1620 = vsel %vm1162, 1, 0
      %v1621 = vsel %vm1163, 1, 0
      %v1622 = vsel %vm1164, 1, 0
      %v1623 = vsel %vm1165, 1, 0
      %v1624 = vcvt.s32.f32 %v1598
      %v1625 = vcvt.s32.f32 %v1599
      %v1626 = vcvt.s32.f32 %v1600
      %v1627 = vcvt.s32.f32 %v1601
      %v1628 = vcvt.s32.f32 %v1602
      %v1629 = vcvt.s32.f32 %v1603
      %v1630 = vcvt.s32.f32 %v1604
      %v1631 = vcvt.s32.f32 %v1605
      %v1632 = vcvt.s32.f32 %v1606
      %v1633 = vcvt.s32.f32 %v1607
      %v1634 = vcvt.s32.f32 %v1608
      %v1635 = vcvt.s32.f32 %v1609
      %v1636 = vcvt.s32.f32 %v1610
      %v1637 = vcvt.s32.f32 %v1611
      %v1638 = vcvt.s32.f32 %v1612
      %v1639 = vcvt.s32.f32 %v1613
      %v1640 = vcvt.s32.f32 %v1614
      %v1641 = vcvt.s32.f32 %v1615
      %v1642 = vcvt.s32.f32 %v1616
      %v1643 = vcvt.s32.f32 %v1617
      %v1644 = vcvt.s32.f32 %v1618
      %v1645 = vcvt.s32.f32 %v1619
      %v1646 = vcvt.s32.f32 %v1620
      %v1647 = vcvt.s32.f32 %v1621
      %v1648 = vcvt.s32.f32 %v1622
      %v1649 = vcvt.s32.f32 %v1623
      %v1650 = vsel %vm1597, 1, 0
      %vm1651 = vcmp.eq.s32.totalorder %v1650, 1
      %1653 = vset.pattern.permute.xlu0 0
      %1654 = vperm.xlu0 %1653, %v1624
      %v1655 = vpop.permute.xlu0 %1654
      %1658 = vset.pattern.permute.xlu0 0
      %1659 = vperm.xlu0 %1658, %v1625
      %v1660 = vpop.permute.xlu0 %1659
      %1663 = vset.pattern.permute.xlu0 0
      %1664 = vperm.xlu0 %1663, %v1626
      %v1665 = vpop.permute.xlu0 %1664
      %1668 = vset.pattern.permute.xlu0 0
      %1669 = vperm.xlu0 %1668, %v1627
      %v1670 = vpop.permute.xlu0 %1669
      %1673 = vset.pattern.permute.xlu0 0
      %1674 = vperm.xlu0 %1673, %v1628
      %v1675 = vpop.permute.xlu0 %1674
      %1678 = vset.pattern.permute.xlu0 0
      %1679 = vperm.xlu0 %1678, %v1629
      %v1680 = vpop.permute.xlu0 %1679
      %1683 = vset.pattern.permute.xlu0 0
      %1684 = vperm.xlu0 %1683, %v1630
      %v1685 = vpop.permute.xlu0 %1684
      %1688 = vset.pattern.permute.xlu0 0
      %1689 = vperm.xlu0 %1688, %v1631
      %v1690 = vpop.permute.xlu0 %1689
      %1693 = vset.pattern.permute.xlu0 0
      %1694 = vperm.xlu0 %1693, %v1632
      %v1695 = vpop.permute.xlu0 %1694
      %1698 = vset.pattern.permute.xlu0 0
      %1699 = vperm.xlu0 %1698, %v1633
      %v1700 = vpop.permute.xlu0 %1699
      %1703 = vset.pattern.permute.xlu0 0
      %1704 = vperm.xlu0 %1703, %v1634
      %v1705 = vpop.permute.xlu0 %1704
      %1708 = vset.pattern.permute.xlu0 0
      %1709 = vperm.xlu0 %1708, %v1635
      %v1710 = vpop.permute.xlu0 %1709
      %1713 = vset.pattern.permute.xlu0 0
      %1714 = vperm.xlu0 %1713, %v1636
      %v1715 = vpop.permute.xlu0 %1714
      %1718 = vset.pattern.permute.xlu0 0
      %1719 = vperm.xlu0 %1718, %v1637
      %v1720 = vpop.permute.xlu0 %1719
      %1723 = vset.pattern.permute.xlu0 0
      %1724 = vperm.xlu0 %1723, %v1638
      %v1725 = vpop.permute.xlu0 %1724
      %1728 = vset.pattern.permute.xlu0 0
      %1729 = vperm.xlu0 %1728, %v1639
      %v1730 = vpop.permute.xlu0 %1729
      %1733 = vset.pattern.permute.xlu0 0
      %1734 = vperm.xlu0 %1733, %v1640
      %v1735 = vpop.permute.xlu0 %1734
      %1738 = vset.pattern.permute.xlu0 0
      %1739 = vperm.xlu0 %1738, %v1641
      %v1740 = vpop.permute.xlu0 %1739
      %1743 = vset.pattern.permute.xlu0 0
      %1744 = vperm.xlu0 %1743, %v1642
      %v1745 = vpop.permute.xlu0 %1744
      %1748 = vset.pattern.permute.xlu0 0
      %1749 = vperm.xlu0 %1748, %v1643
      %v1750 = vpop.permute.xlu0 %1749
      %1753 = vset.pattern.permute.xlu0 0
      %1754 = vperm.xlu0 %1753, %v1644
      %v1755 = vpop.permute.xlu0 %1754
      %1758 = vset.pattern.permute.xlu0 0
      %1759 = vperm.xlu0 %1758, %v1645
      %v1760 = vpop.permute.xlu0 %1759
      %1763 = vset.pattern.permute.xlu0 0
      %1764 = vperm.xlu0 %1763, %v1646
      %v1765 = vpop.permute.xlu0 %1764
      %1768 = vset.pattern.permute.xlu0 0
      %1769 = vperm.xlu0 %1768, %v1647
      %v1770 = vpop.permute.xlu0 %1769
      %1773 = vset.pattern.permute.xlu0 0
      %1774 = vperm.xlu0 %1773, %v1648
      %v1775 = vpop.permute.xlu0 %1774
      %1778 = vset.pattern.permute.xlu0 0
      %1779 = vperm.xlu0 %1778, %v1649
      %v1780 = vpop.permute.xlu0 %1779
      %v1782 = vsel %vm1651, %v1655, 0.0
      %v1783 = vsel %vm1651, %v1660, 0.0
      %v1784 = vsel %vm1651, %v1665, 0.0
      %v1785 = vsel %vm1651, %v1670, 0.0
      %v1786 = vsel %vm1651, %v1675, 0.0
      %v1787 = vsel %vm1651, %v1680, 0.0
      %v1788 = vsel %vm1651, %v1685, 0.0
      %v1789 = vsel %vm1651, %v1690, 0.0
      %v1790 = vsel %vm1651, %v1695, 0.0
      %v1791 = vsel %vm1651, %v1700, 0.0
      %v1792 = vsel %vm1651, %v1705, 0.0
      %v1793 = vsel %vm1651, %v1710, 0.0
      %v1794 = vsel %vm1651, %v1715, 0.0
      %v1795 = vsel %vm1651, %v1720, 0.0
      %v1796 = vsel %vm1651, %v1725, 0.0
      %v1797 = vsel %vm1651, %v1730, 0.0
      %v1798 = vsel %vm1651, %v1735, 0.0
      %v1799 = vsel %vm1651, %v1740, 0.0
      %v1800 = vsel %vm1651, %v1745, 0.0
      %v1801 = vsel %vm1651, %v1750, 0.0
      %v1802 = vsel %vm1651, %v1755, 0.0
      %v1803 = vsel %vm1651, %v1760, 0.0
      %v1804 = vsel %vm1651, %v1765, 0.0
      %v1805 = vsel %vm1651, %v1770, 0.0
      %v1806 = vsel %vm1651, %v1775, 0.0
      %v1807 = vsel %vm1651, %v1780, 0.0
      %v1808 = vsel %vm1596, 1, 0
      %vm1809 = vcmp.eq.s32.totalorder %v1808, 1
      %v1810 = vsel %vm1809, %v986, %v1782
      %v1811 = vsel %vm1809, %v989, %v1783
      %v1812 = vsel %vm1809, %v992, %v1784
      %v1813 = vsel %vm1809, %v995, %v1785
      %v1814 = vsel %vm1809, %v998, %v1786
      %v1815 = vsel %vm1809, %v1001, %v1787
      %v1816 = vsel %vm1809, %v1004, %v1788
      %v1817 = vsel %vm1809, %v1007, %v1789
      %v1818 = vsel %vm1809, %v1010, %v1790
      %v1819 = vsel %vm1809, %v1013, %v1791
      %v1820 = vsel %vm1809, %v1016, %v1792
      %v1821 = vsel %vm1809, %v1019, %v1793
      %v1822 = vsel %vm1809, %v1022, %v1794
      %v1823 = vsel %vm1809, %v1025, %v1795
      %v1824 = vsel %vm1809, %v1028, %v1796
      %v1825 = vsel %vm1809, %v1031, %v1797
      %v1826 = vsel %vm1809, %v1034, %v1798
      %v1827 = vsel %vm1809, %v1037, %v1799
      %v1828 = vsel %vm1809, %v1040, %v1800
      %v1829 = vsel %vm1809, %v1043, %v1801
      %v1830 = vsel %vm1809, %v1046, %v1802
      %v1831 = vsel %vm1809, %v1049, %v1803
      %v1832 = vsel %vm1809, %v1052, %v1804
      %v1833 = vsel %vm1809, %v1055, %v1805
      %v1834 = vsel %vm1809, %v1058, %v1806
      %v1835 = vsel %vm1809, %v1061, %v1807
      %v1836 = vsel %vm1403, 1, 0
      %vm1837 = vcmp.eq.s32.totalorder %v1836, 1
      %v1838 = vsel %vm1837, %v580, %v1810
      %v1839 = vsel %vm1837, %v594, %v1811
      %v1840 = vsel %vm1837, %v608, %v1812
      %v1841 = vsel %vm1837, %v622, %v1813
      %v1842 = vsel %vm1837, %v636, %v1814
      %v1843 = vsel %vm1837, %v650, %v1815
      %v1844 = vsel %vm1837, %v664, %v1816
      %v1845 = vsel %vm1837, %v678, %v1817
      %v1846 = vsel %vm1837, %v692, %v1818
      %v1847 = vsel %vm1837, %v706, %v1819
      %v1848 = vsel %vm1837, %v720, %v1820
      %v1849 = vsel %vm1837, %v734, %v1821
      %v1850 = vsel %vm1837, %v748, %v1822
      %v1851 = vsel %vm1837, %v762, %v1823
      %v1852 = vsel %vm1837, %v776, %v1824
      %v1853 = vsel %vm1837, %v790, %v1825
      %v1854 = vsel %vm1837, %v804, %v1826
      %v1855 = vsel %vm1837, %v818, %v1827
      %v1856 = vsel %vm1837, %v832, %v1828
      %v1857 = vsel %vm1837, %v846, %v1829
      %v1858 = vsel %vm1837, %v860, %v1830
      %v1859 = vsel %vm1837, %v874, %v1831
      %v1860 = vsel %vm1837, %v888, %v1832
      %v1861 = vsel %vm1837, %v902, %v1833
      %v1862 = vsel %vm1837, %v916, %v1834
      %v1863 = vsel %vm1837, %v930, %v1835
      %1890 = vrot.lane.b32.xlu0 %v1434, 4
      %v1891 = vpop.permute.xlu0 %1890
      %1892 = vrot.lane.b32.xlu0 %v1435, 4
      %v1893 = vpop.permute.xlu0 %1892
      %1894 = vrot.lane.b32.xlu0 %v1436, 4
      %v1895 = vpop.permute.xlu0 %1894
      %1896 = vrot.lane.b32.xlu0 %v1437, 4
      %v1897 = vpop.permute.xlu0 %1896
      %1898 = vrot.lane.b32.xlu0 %v1438, 4
      %v1899 = vpop.permute.xlu0 %1898
      %1900 = vrot.lane.b32.xlu0 %v1439, 4
      %v1901 = vpop.permute.xlu0 %1900
      %1902 = vrot.lane.b32.xlu0 %v1440, 4
      %v1903 = vpop.permute.xlu0 %1902
      %1904 = vrot.lane.b32.xlu0 %v1441, 4
      %v1905 = vpop.permute.xlu0 %1904
      %1906 = vrot.lane.b32.xlu0 %v1442, 4
      %v1907 = vpop.permute.xlu0 %1906
      %1908 = vrot.lane.b32.xlu0 %v1443, 4
      %v1909 = vpop.permute.xlu0 %1908
      %1910 = vrot.lane.b32.xlu0 %v1444, 4
      %v1911 = vpop.permute.xlu0 %1910
      %1912 = vrot.lane.b32.xlu0 %v1445, 4
      %v1913 = vpop.permute.xlu0 %1912
      %1914 = vrot.lane.b32.xlu0 %v1446, 4
      %v1915 = vpop.permute.xlu0 %1914
      %1916 = vrot.lane.b32.xlu0 %v1447, 4
      %v1917 = vpop.permute.xlu0 %1916
      %1918 = vrot.lane.b32.xlu0 %v1448, 4
      %v1919 = vpop.permute.xlu0 %1918
      %1920 = vrot.lane.b32.xlu0 %v1449, 4
      %v1921 = vpop.permute.xlu0 %1920
      %1922 = vrot.lane.b32.xlu0 %v1450, 4
      %v1923 = vpop.permute.xlu0 %1922
      %1924 = vrot.lane.b32.xlu0 %v1451, 4
      %v1925 = vpop.permute.xlu0 %1924
      %1926 = vrot.lane.b32.xlu0 %v1452, 4
      %v1927 = vpop.permute.xlu0 %1926
      %1928 = vrot.lane.b32.xlu0 %v1453, 4
      %v1929 = vpop.permute.xlu0 %1928
      %1930 = vrot.lane.b32.xlu0 %v1454, 4
      %v1931 = vpop.permute.xlu0 %1930
      %1932 = vrot.lane.b32.xlu0 %v1455, 4
      %v1933 = vpop.permute.xlu0 %1932
      %1934 = vrot.lane.b32.xlu0 %v1456, 4
      %v1935 = vpop.permute.xlu0 %1934
      %1936 = vrot.lane.b32.xlu0 %v1457, 4
      %v1937 = vpop.permute.xlu0 %1936
      %1938 = vrot.lane.b32.xlu0 %v1458, 4
      %v1939 = vpop.permute.xlu0 %1938
      %1940 = vrot.lane.b32.xlu0 %v1459, 4
      %v1941 = vpop.permute.xlu0 %1940
      %1994 = vrot.lane.b32.xlu0 %v1544, 8
      %v1995 = vpop.permute.xlu0 %1994
      %1996 = vrot.lane.b32.xlu0 %v1545, 8
      %v1997 = vpop.permute.xlu0 %1996
      %1998 = vrot.lane.b32.xlu0 %v1546, 8
      %v1999 = vpop.permute.xlu0 %1998
      %2000 = vrot.lane.b32.xlu0 %v1547, 8
      %v2001 = vpop.permute.xlu0 %2000
      %2002 = vrot.lane.b32.xlu0 %v1548, 8
      %v2003 = vpop.permute.xlu0 %2002
      %2004 = vrot.lane.b32.xlu0 %v1549, 8
      %v2005 = vpop.permute.xlu0 %2004
      %2006 = vrot.lane.b32.xlu0 %v1550, 8
      %v2007 = vpop.permute.xlu0 %2006
      %2008 = vrot.lane.b32.xlu0 %v1551, 8
      %v2009 = vpop.permute.xlu0 %2008
      %2010 = vrot.lane.b32.xlu0 %v1552, 8
      %v2011 = vpop.permute.xlu0 %2010
      %2012 = vrot.lane.b32.xlu0 %v1553, 8
      %v2013 = vpop.permute.xlu0 %2012
      %2014 = vrot.lane.b32.xlu0 %v1554, 8
      %v2015 = vpop.permute.xlu0 %2014
      %2016 = vrot.lane.b32.xlu0 %v1555, 8
      %v2017 = vpop.permute.xlu0 %2016
      %2018 = vrot.lane.b32.xlu0 %v1556, 8
      %v2019 = vpop.permute.xlu0 %2018
      %2020 = vrot.lane.b32.xlu0 %v1557, 8
      %v2021 = vpop.permute.xlu0 %2020
      %2022 = vrot.lane.b32.xlu0 %v1558, 8
      %v2023 = vpop.permute.xlu0 %2022
      %2024 = vrot.lane.b32.xlu0 %v1559, 8
      %v2025 = vpop.permute.xlu0 %2024
      %2026 = vrot.lane.b32.xlu0 %v1560, 8
      %v2027 = vpop.permute.xlu0 %2026
      %2028 = vrot.lane.b32.xlu0 %v1561, 8
      %v2029 = vpop.permute.xlu0 %2028
      %2030 = vrot.lane.b32.xlu0 %v1562, 8
      %v2031 = vpop.permute.xlu0 %2030
      %2032 = vrot.lane.b32.xlu0 %v1563, 8
      %v2033 = vpop.permute.xlu0 %2032
      %2034 = vrot.lane.b32.xlu0 %v1564, 8
      %v2035 = vpop.permute.xlu0 %2034
      %2036 = vrot.lane.b32.xlu0 %v1565, 8
      %v2037 = vpop.permute.xlu0 %2036
      %2038 = vrot.lane.b32.xlu0 %v1566, 8
      %v2039 = vpop.permute.xlu0 %2038
      %2040 = vrot.lane.b32.xlu0 %v1567, 8
      %v2041 = vpop.permute.xlu0 %2040
      %2042 = vrot.lane.b32.xlu0 %v1568, 8
      %v2043 = vpop.permute.xlu0 %2042
      %2044 = vrot.lane.b32.xlu0 %v1569, 8
      %v2045 = vpop.permute.xlu0 %2044
      %2098 = vrot.lane.b32.xlu0 %v1486, 12
      %v2099 = vpop.permute.xlu0 %2098
      %2100 = vrot.lane.b32.xlu0 %v1487, 12
      %v2101 = vpop.permute.xlu0 %2100
      %2102 = vrot.lane.b32.xlu0 %v1488, 12
      %v2103 = vpop.permute.xlu0 %2102
      %2104 = vrot.lane.b32.xlu0 %v1489, 12
      %v2105 = vpop.permute.xlu0 %2104
      %2106 = vrot.lane.b32.xlu0 %v1490, 12
      %v2107 = vpop.permute.xlu0 %2106
      %2108 = vrot.lane.b32.xlu0 %v1491, 12
      %v2109 = vpop.permute.xlu0 %2108
      %2110 = vrot.lane.b32.xlu0 %v1492, 12
      %v2111 = vpop.permute.xlu0 %2110
      %2112 = vrot.lane.b32.xlu0 %v1493, 12
      %v2113 = vpop.permute.xlu0 %2112
      %2114 = vrot.lane.b32.xlu0 %v1494, 12
      %v2115 = vpop.permute.xlu0 %2114
      %2116 = vrot.lane.b32.xlu0 %v1495, 12
      %v2117 = vpop.permute.xlu0 %2116
      %2118 = vrot.lane.b32.xlu0 %v1496, 12
      %v2119 = vpop.permute.xlu0 %2118
      %2120 = vrot.lane.b32.xlu0 %v1497, 12
      %v2121 = vpop.permute.xlu0 %2120
      %2122 = vrot.lane.b32.xlu0 %v1498, 12
      %v2123 = vpop.permute.xlu0 %2122
      %2124 = vrot.lane.b32.xlu0 %v1499, 12
      %v2125 = vpop.permute.xlu0 %2124
      %2126 = vrot.lane.b32.xlu0 %v1500, 12
      %v2127 = vpop.permute.xlu0 %2126
      %2128 = vrot.lane.b32.xlu0 %v1501, 12
      %v2129 = vpop.permute.xlu0 %2128
      %2130 = vrot.lane.b32.xlu0 %v1502, 12
      %v2131 = vpop.permute.xlu0 %2130
      %2132 = vrot.lane.b32.xlu0 %v1503, 12
      %v2133 = vpop.permute.xlu0 %2132
      %2134 = vrot.lane.b32.xlu0 %v1504, 12
      %v2135 = vpop.permute.xlu0 %2134
      %2136 = vrot.lane.b32.xlu0 %v1505, 12
      %v2137 = vpop.permute.xlu0 %2136
      %2138 = vrot.lane.b32.xlu0 %v1506, 12
      %v2139 = vpop.permute.xlu0 %2138
      %2140 = vrot.lane.b32.xlu0 %v1507, 12
      %v2141 = vpop.permute.xlu0 %2140
      %2142 = vrot.lane.b32.xlu0 %v1508, 12
      %v2143 = vpop.permute.xlu0 %2142
      %2144 = vrot.lane.b32.xlu0 %v1509, 12
      %v2145 = vpop.permute.xlu0 %2144
      %2146 = vrot.lane.b32.xlu0 %v1510, 12
      %v2147 = vpop.permute.xlu0 %2146
      %2148 = vrot.lane.b32.xlu0 %v1511, 12
      %v2149 = vpop.permute.xlu0 %2148
      %2202 = vrot.lane.b32.xlu0 %v1512, 16
      %v2203 = vpop.permute.xlu0 %2202
      %2204 = vrot.lane.b32.xlu0 %v1513, 16
      %v2205 = vpop.permute.xlu0 %2204
      %2206 = vrot.lane.b32.xlu0 %v1514, 16
      %v2207 = vpop.permute.xlu0 %2206
      %2208 = vrot.lane.b32.xlu0 %v1515, 16
      %v2209 = vpop.permute.xlu0 %2208
      %2210 = vrot.lane.b32.xlu0 %v1516, 16
      %v2211 = vpop.permute.xlu0 %2210
      %2212 = vrot.lane.b32.xlu0 %v1517, 16
      %v2213 = vpop.permute.xlu0 %2212
      %2214 = vrot.lane.b32.xlu0 %v1518, 16
      %v2215 = vpop.permute.xlu0 %2214
      %2216 = vrot.lane.b32.xlu0 %v1519, 16
      %v2217 = vpop.permute.xlu0 %2216
      %2218 = vrot.lane.b32.xlu0 %v1520, 16
      %v2219 = vpop.permute.xlu0 %2218
      %2220 = vrot.lane.b32.xlu0 %v1521, 16
      %v2221 = vpop.permute.xlu0 %2220
      %2222 = vrot.lane.b32.xlu0 %v1522, 16
      %v2223 = vpop.permute.xlu0 %2222
      %2224 = vrot.lane.b32.xlu0 %v1523, 16
      %v2225 = vpop.permute.xlu0 %2224
      %2226 = vrot.lane.b32.xlu0 %v1524, 16
      %v2227 = vpop.permute.xlu0 %2226
      %2228 = vrot.lane.b32.xlu0 %v1525, 16
      %v2229 = vpop.permute.xlu0 %2228
      %2230 = vrot.lane.b32.xlu0 %v1526, 16
      %v2231 = vpop.permute.xlu0 %2230
      %2232 = vrot.lane.b32.xlu0 %v1527, 16
      %v2233 = vpop.permute.xlu0 %2232
      %2234 = vrot.lane.b32.xlu0 %v1528, 16
      %v2235 = vpop.permute.xlu0 %2234
      %2236 = vrot.lane.b32.xlu0 %v1529, 16
      %v2237 = vpop.permute.xlu0 %2236
      %2238 = vrot.lane.b32.xlu0 %v1530, 16
      %v2239 = vpop.permute.xlu0 %2238
      %2240 = vrot.lane.b32.xlu0 %v1531, 16
      %v2241 = vpop.permute.xlu0 %2240
      %2242 = vrot.lane.b32.xlu0 %v1532, 16
      %v2243 = vpop.permute.xlu0 %2242
      %2244 = vrot.lane.b32.xlu0 %v1533, 16
      %v2245 = vpop.permute.xlu0 %2244
      %2246 = vrot.lane.b32.xlu0 %v1534, 16
      %v2247 = vpop.permute.xlu0 %2246
      %2248 = vrot.lane.b32.xlu0 %v1535, 16
      %v2249 = vpop.permute.xlu0 %2248
      %2250 = vrot.lane.b32.xlu0 %v1536, 16
      %v2251 = vpop.permute.xlu0 %2250
      %2252 = vrot.lane.b32.xlu0 %v1537, 16
      %v2253 = vpop.permute.xlu0 %2252
      %2306 = vrot.lane.b32.xlu0 %v1570, 20
      %v2307 = vpop.permute.xlu0 %2306
      %2308 = vrot.lane.b32.xlu0 %v1571, 20
      %v2309 = vpop.permute.xlu0 %2308
      %2310 = vrot.lane.b32.xlu0 %v1572, 20
      %v2311 = vpop.permute.xlu0 %2310
      %2312 = vrot.lane.b32.xlu0 %v1573, 20
      %v2313 = vpop.permute.xlu0 %2312
      %2314 = vrot.lane.b32.xlu0 %v1574, 20
      %v2315 = vpop.permute.xlu0 %2314
      %2316 = vrot.lane.b32.xlu0 %v1575, 20
      %v2317 = vpop.permute.xlu0 %2316
      %2318 = vrot.lane.b32.xlu0 %v1576, 20
      %v2319 = vpop.permute.xlu0 %2318
      %2320 = vrot.lane.b32.xlu0 %v1577, 20
      %v2321 = vpop.permute.xlu0 %2320
      %2322 = vrot.lane.b32.xlu0 %v1578, 20
      %v2323 = vpop.permute.xlu0 %2322
      %2324 = vrot.lane.b32.xlu0 %v1579, 20
      %v2325 = vpop.permute.xlu0 %2324
      %2326 = vrot.lane.b32.xlu0 %v1580, 20
      %v2327 = vpop.permute.xlu0 %2326
      %2328 = vrot.lane.b32.xlu0 %v1581, 20
      %v2329 = vpop.permute.xlu0 %2328
      %2330 = vrot.lane.b32.xlu0 %v1582, 20
      %v2331 = vpop.permute.xlu0 %2330
      %2332 = vrot.lane.b32.xlu0 %v1583, 20
      %v2333 = vpop.permute.xlu0 %2332
      %2334 = vrot.lane.b32.xlu0 %v1584, 20
      %v2335 = vpop.permute.xlu0 %2334
      %2336 = vrot.lane.b32.xlu0 %v1585, 20
      %v2337 = vpop.permute.xlu0 %2336
      %2338 = vrot.lane.b32.xlu0 %v1586, 20
      %v2339 = vpop.permute.xlu0 %2338
      %2340 = vrot.lane.b32.xlu0 %v1587, 20
      %v2341 = vpop.permute.xlu0 %2340
      %2342 = vrot.lane.b32.xlu0 %v1588, 20
      %v2343 = vpop.permute.xlu0 %2342
      %2344 = vrot.lane.b32.xlu0 %v1589, 20
      %v2345 = vpop.permute.xlu0 %2344
      %2346 = vrot.lane.b32.xlu0 %v1590, 20
      %v2347 = vpop.permute.xlu0 %2346
      %2348 = vrot.lane.b32.xlu0 %v1591, 20
      %v2349 = vpop.permute.xlu0 %2348
      %2350 = vrot.lane.b32.xlu0 %v1592, 20
      %v2351 = vpop.permute.xlu0 %2350
      %2352 = vrot.lane.b32.xlu0 %v1593, 20
      %v2353 = vpop.permute.xlu0 %2352
      %2354 = vrot.lane.b32.xlu0 %v1594, 20
      %v2355 = vpop.permute.xlu0 %2354
      %2356 = vrot.lane.b32.xlu0 %v1595, 20
      %v2357 = vpop.permute.xlu0 %2356
      %vm2384 = vcmask 31744
      %v2385 = vsel %vm2384, %v1838, %v1891
      %v2386 = vsel %vm2384, %v1839, %v1893
      %v2387 = vsel %vm2384, %v1840, %v1895
      %v2388 = vsel %vm2384, %v1841, %v1897
      %v2389 = vsel %vm2384, %v1842, %v1899
      %v2390 = vsel %vm2384, %v1843, %v1901
      %v2391 = vsel %vm2384, %v1844, %v1903
      %v2392 = vsel %vm2384, %v1845, %v1905
      %v2393 = vsel %vm2384, %v1846, %v1907
      %v2394 = vsel %vm2384, %v1847, %v1909
      %v2395 = vsel %vm2384, %v1848, %v1911
      %v2396 = vsel %vm2384, %v1849, %v1913
      %v2397 = vsel %vm2384, %v1850, %v1915
      %v2398 = vsel %vm2384, %v1851, %v1917
      %v2399 = vsel %vm2384, %v1852, %v1919
      %v2400 = vsel %vm2384, %v1853, %v1921
      %v2401 = vsel %vm2384, %v1854, %v1923
      %v2402 = vsel %vm2384, %v1855, %v1925
      %v2403 = vsel %vm2384, %v1856, %v1927
      %v2404 = vsel %vm2384, %v1857, %v1929
      %v2405 = vsel %vm2384, %v1858, %v1931
      %v2406 = vsel %vm2384, %v1859, %v1933
      %v2407 = vsel %vm2384, %v1860, %v1935
      %v2408 = vsel %vm2384, %v1861, %v1937
      %v2409 = vsel %vm2384, %v1862, %v1939
      %v2410 = vsel %vm2384, %v1863, %v1941
      %vm2411 = vcmask 64512
      %v2412 = vsel %vm2411, %v2385, %v1995
      %v2413 = vsel %vm2411, %v2386, %v1997
      %v2414 = vsel %vm2411, %v2387, %v1999
      %v2415 = vsel %vm2411, %v2388, %v2001
      %v2416 = vsel %vm2411, %v2389, %v2003
      %v2417 = vsel %vm2411, %v2390, %v2005
      %v2418 = vsel %vm2411, %v2391, %v2007
      %v2419 = vsel %vm2411, %v2392, %v2009
      %v2420 = vsel %vm2411, %v2393, %v2011
      %v2421 = vsel %vm2411, %v2394, %v2013
      %v2422 = vsel %vm2411, %v2395, %v2015
      %v2423 = vsel %vm2411, %v2396, %v2017
      %v2424 = vsel %vm2411, %v2397, %v2019
      %v2425 = vsel %vm2411, %v2398, %v2021
      %v2426 = vsel %vm2411, %v2399, %v2023
      %v2427 = vsel %vm2411, %v2400, %v2025
      %v2428 = vsel %vm2411, %v2401, %v2027
      %v2429 = vsel %vm2411, %v2402, %v2029
      %v2430 = vsel %vm2411, %v2403, %v2031
      %v2431 = vsel %vm2411, %v2404, %v2033
      %v2432 = vsel %vm2411, %v2405, %v2035
      %v2433 = vsel %vm2411, %v2406, %v2037
      %v2434 = vsel %vm2411, %v2407, %v2039
      %v2435 = vsel %vm2411, %v2408, %v2041
      %v2436 = vsel %vm2411, %v2409, %v2043
      %v2437 = vsel %vm2411, %v2410, %v2045
      %vm2438 = vcmask 97280
      %v2439 = vsel %vm2438, %v2412, %v2099
      %v2440 = vsel %vm2438, %v2413, %v2101
      %v2441 = vsel %vm2438, %v2414, %v2103
      %v2442 = vsel %vm2438, %v2415, %v2105
      %v2443 = vsel %vm2438, %v2416, %v2107
      %v2444 = vsel %vm2438, %v2417, %v2109
      %v2445 = vsel %vm2438, %v2418, %v2111
      %v2446 = vsel %vm2438, %v2419, %v2113
      %v2447 = vsel %vm2438, %v2420, %v2115
      %v2448 = vsel %vm2438, %v2421, %v2117
      %v2449 = vsel %vm2438, %v2422, %v2119
      %v2450 = vsel %vm2438, %v2423, %v2121
      %v2451 = vsel %vm2438, %v2424, %v2123
      %v2452 = vsel %vm2438, %v2425, %v2125
      %v2453 = vsel %vm2438, %v2426, %v2127
      %v2454 = vsel %vm2438, %v2427, %v2129
      %v2455 = vsel %vm2438, %v2428, %v2131
      %v2456 = vsel %vm2438, %v2429, %v2133
      %v2457 = vsel %vm2438, %v2430, %v2135
      %v2458 = vsel %vm2438, %v2431, %v2137
      %v2459 = vsel %vm2438, %v2432, %v2139
      %v2460 = vsel %vm2438, %v2433, %v2141
      %v2461 = vsel %vm2438, %v2434, %v2143
      %v2462 = vsel %vm2438, %v2435, %v2145
      %v2463 = vsel %vm2438, %v2436, %v2147
      %v2464 = vsel %vm2438, %v2437, %v2149
      %vm2465 = vcmask 130048
      %v2466 = vsel %vm2465, %v2439, %v2203
      %v2467 = vsel %vm2465, %v2440, %v2205
      %v2468 = vsel %vm2465, %v2441, %v2207
      %v2469 = vsel %vm2465, %v2442, %v2209
      %v2470 = vsel %vm2465, %v2443, %v2211
      %v2471 = vsel %vm2465, %v2444, %v2213
      %v2472 = vsel %vm2465, %v2445, %v2215
      %v2473 = vsel %vm2465, %v2446, %v2217
      %v2474 = vsel %vm2465, %v2447, %v2219
      %v2475 = vsel %vm2465, %v2448, %v2221
      %v2476 = vsel %vm2465, %v2449, %v2223
      %v2477 = vsel %vm2465, %v2450, %v2225
      %v2478 = vsel %vm2465, %v2451, %v2227
      %v2479 = vsel %vm2465, %v2452, %v2229
      %v2480 = vsel %vm2465, %v2453, %v2231
      %v2481 = vsel %vm2465, %v2454, %v2233
      %v2482 = vsel %vm2465, %v2455, %v2235
      %v2483 = vsel %vm2465, %v2456, %v2237
      %v2484 = vsel %vm2465, %v2457, %v2239
      %v2485 = vsel %vm2465, %v2458, %v2241
      %v2486 = vsel %vm2465, %v2459, %v2243
      %v2487 = vsel %vm2465, %v2460, %v2245
      %v2488 = vsel %vm2465, %v2461, %v2247
      %v2489 = vsel %vm2465, %v2462, %v2249
      %v2490 = vsel %vm2465, %v2463, %v2251
      %v2491 = vsel %vm2465, %v2464, %v2253
      %vm2492 = vcmask 162816
      %v2493 = vsel %vm2492, %v2466, %v2307
      %v2494 = vsel %vm2492, %v2467, %v2309
      %v2495 = vsel %vm2492, %v2468, %v2311
      %v2496 = vsel %vm2492, %v2469, %v2313
      %v2497 = vsel %vm2492, %v2470, %v2315
      %v2498 = vsel %vm2492, %v2471, %v2317
      %v2499 = vsel %vm2492, %v2472, %v2319
      %v2500 = vsel %vm2492, %v2473, %v2321
      %v2501 = vsel %vm2492, %v2474, %v2323
      %v2502 = vsel %vm2492, %v2475, %v2325
      %v2503 = vsel %vm2492, %v2476, %v2327
      %v2504 = vsel %vm2492, %v2477, %v2329
      %v2505 = vsel %vm2492, %v2478, %v2331
      %v2506 = vsel %vm2492, %v2479, %v2333
      %v2507 = vsel %vm2492, %v2480, %v2335
      %v2508 = vsel %vm2492, %v2481, %v2337
      %v2509 = vsel %vm2492, %v2482, %v2339
      %v2510 = vsel %vm2492, %v2483, %v2341
      %v2511 = vsel %vm2492, %v2484, %v2343
      %v2512 = vsel %vm2492, %v2485, %v2345
      %v2513 = vsel %vm2492, %v2486, %v2347
      %v2514 = vsel %vm2492, %v2487, %v2349
      %v2515 = vsel %vm2492, %v2488, %v2351
      %v2516 = vsel %vm2492, %v2489, %v2353
      %v2517 = vsel %vm2492, %v2490, %v2355
      %v2518 = vsel %vm2492, %v2491, %v2357
      %vm2519 = vcmask 195584
      %2520 = vst.msk [vmem:[%s273] sm:$0xff] %vm2519, %v2493
      %2521 = vst.msk [vmem:[%s273 + $0x8] sm:$0xff] %vm2519, %v2494
      %2522 = vst.msk [vmem:[%s273 + $0x10] sm:$0xff] %vm2519, %v2495
      %2523 = vst.msk [vmem:[%s273 + $0x18] sm:$0xff] %vm2519, %v2496
      %2524 = vst.msk [vmem:[%s273 + $0x20] sm:$0xff] %vm2519, %v2497
      %2525 = vst.msk [vmem:[%s273 + $0x28] sm:$0xff] %vm2519, %v2498
      %2526 = vst.msk [vmem:[%s273 + $0x30] sm:$0xff] %vm2519, %v2499
      %2527 = vst.msk [vmem:[%s273 + $0x38] sm:$0xff] %vm2519, %v2500
      %2528 = vst.msk [vmem:[%s273 + $0x40] sm:$0xff] %vm2519, %v2501
      %2529 = vst.msk [vmem:[%s273 + $0x48] sm:$0xff] %vm2519, %v2502
      %2530 = vst.msk [vmem:[%s273 + $0x50] sm:$0xff] %vm2519, %v2503
      %2531 = vst.msk [vmem:[%s273 + $0x58] sm:$0xff] %vm2519, %v2504
      %vm2532 = vcmask 191488
      %2533 = vst.msk [vmem:[%s273 + $0x60] sm:$0xf] %vm2532, %v2505
      %2534 = vst.msk [vmem:[%s273 + $0x68] sm:$0xff] %vm2519, %v2506
      %2535 = vst.msk [vmem:[%s273 + $0x70] sm:$0xff] %vm2519, %v2507
      %2536 = vst.msk [vmem:[%s273 + $0x78] sm:$0xff] %vm2519, %v2508
      %2537 = vst.msk [vmem:[%s273 + $0x80] sm:$0xff] %vm2519, %v2509
      %2538 = vst.msk [vmem:[%s273 + $0x88] sm:$0xff] %vm2519, %v2510
      %2539 = vst.msk [vmem:[%s273 + $0x90] sm:$0xff] %vm2519, %v2511
      %2540 = vst.msk [vmem:[%s273 + $0x98] sm:$0xff] %vm2519, %v2512
      %2541 = vst.msk [vmem:[%s273 + $0xa0] sm:$0xff] %vm2519, %v2513
      %2542 = vst.msk [vmem:[%s273 + $0xa8] sm:$0xff] %vm2519, %v2514
      %2543 = vst.msk [vmem:[%s273 + $0xb0] sm:$0xff] %vm2519, %v2515
      %2544 = vst.msk [vmem:[%s273 + $0xb8] sm:$0xff] %vm2519, %v2516
      %2545 = vst.msk [vmem:[%s273 + $0xc0] sm:$0xff] %vm2519, %v2517
      %2546 = vst.msk [vmem:[%s273 + $0xc8] sm:$0xf] %vm2532, %v2518
      %s2547 = smul.u32 2, %s15
      %p2548 = scmp.lt.s32.totalorder %s2547, 3
      %s2549 = scalar_select %p2548, %s2547, 3
      %s2550 = smul.addr %s2549, 13
      %s2551 = smul.addr %s2550, 8
      %s2552 = scalar_lea.vmem %s4, %s2551
      // Predicated region
      $region37: #{tpu_custom_call.1} parent=35 // pred_check
        %p2553 = pneg %p137
      $region38: #{tpu_custom_call.1} parent=35 // pred_check_branch
        %2555 = sbr.rel (%p2553) target = $region40
      $region39: #{tpu_custom_call.1} parent=35 // pred_region
        %s2556 = smul.u32 2, %s15
      $region40: #{tpu_custom_call.1} parent=35 // pred_fallthru
        _
    $region36: #{tpu_custom_call.1} parent=5 // pred_fallthru
      _
    %p2557 = scmp.le.s32.totalorder 2, %s10
    // Predicated region
    $region41: #{tpu_custom_call.1} parent=5 // pred_check
      %p2558 = pneg %p2557
    $region42: #{tpu_custom_call.1} parent=5 // pred_check_branch
      %2560 = sbr.rel (%p2558) target = $region44
    $region43: #{tpu_custom_call.1} parent=5 // pred_region
      %s2561 = ssub.s32 %s10, 2
      // Predicated region
      $region45: #{tpu_custom_call.1} parent=43 // pred_check
        %p2562 = pneg %p143
      $region46: #{tpu_custom_call.1} parent=43 // pred_check_branch
        %2564 = sbr.rel (%p2562) target = $region48
      $region47: #{tpu_custom_call.1} parent=43 // pred_region
        %s2565 = smul.u32 2, %s16
        %p2566 = scmp.lt.s32.totalorder %s2565, 3
        %s2567 = scalar_select %p2566, %s2565, 3
        %s2568 = smul.addr %s2567, 13
        %s2569 = smul.addr %s2568, 8
        %s2570 = scalar_lea.vmem %s4, %s2569
      $region48: #{tpu_custom_call.1} parent=43 // pred_fallthru
        _
    $region44: #{tpu_custom_call.1} parent=5 // pred_fallthru
      _
  $region6: #{tpu_custom_call.1} parent=0 // loop_footer
    %s14 = sadd.s32 1, %s10
  $region7: #{tpu_custom_call.1} parent=0 // loop_footer_branch
    %9 = sbr.rel target = $region3
  $region8: #{tpu_custom_call.1} parent=0 // loop_exit
    _

</llo_original>
